<compile_context>
chip_gen: v5e
topology: v5e:2x2
jax: 0.10.0
libtpu: 0.0.40
codegen_flags: <defaults>
</compile_context>

<pallas_src>
import jax
import jax.numpy as jnp
from jax import lax
from jax.experimental import pallas as pl
from jax.experimental.pallas import tpu as pltpu

NUM_CLASSES = 32  # stand-in for len(vocab)
HIDDEN = 64
GATE_PAD = 128    # each LSTM gate padded to a full 128-lane block
OUT_PAD = 128     # lane-dense logits slab, sliced back to NUM_CLASSES
FEAT_PAD = 128    # lane-dense conv2+mean feature slab fed to the LSTM


def _round_up(x, m):
    return (x + m - 1) // m * m


def _vmem_spec():
    # Whole-array VMEM block (all LSTM operands are small).
    return pl.BlockSpec(memory_space=pltpu.MemorySpace.VMEM)


def _pick_tm(m):
    # Large tiles amortize the ~0.35us/grid-step overhead (v5e/v6e, 1 TC);
    # >=2 blocks at realistic sizes keeps both v7x TensorCores busy and the
    # (TM, Cout) f32 out block + bf16 in blocks comfortably inside VMEM.
    if m >= 1024:
        return 512
    if m >= 256:
        return 128
    return _round_up(max(m, 8), 8)


# ---------------------------------------------------------------------------
# Kernel 1: matmul + bias + ReLU (conv1 via im2col), gridded over M.
# bf16 operands, f32 accumulate; output at native channel width.
# ---------------------------------------------------------------------------
def _matmul_bias_relu_kernel(a_ref, w_ref, b_ref, o_ref):
    acc = jnp.dot(a_ref[...], w_ref[...], preferred_element_type=jnp.float32)
    o_ref[...] = jnp.maximum(acc + b_ref[...], 0.0)


def matmul_bias_relu(a, w, b):
    # a: (M, K) bf16, w: (K, N) bf16, b: (N,) f32
    M, K = a.shape
    N = w.shape[1]
    TM = _pick_tm(M)
    MP = _round_up(M, TM)
    if MP != M:
        a = jnp.pad(a, ((0, MP - M), (0, 0)))
    out = pl.pallas_call(
        _matmul_bias_relu_kernel,
        out_shape=jax.ShapeDtypeStruct((MP, N), jnp.float32),
        grid_spec=pltpu.PrefetchScalarGridSpec(
            num_scalar_prefetch=0,
            grid=(MP // TM,),
            in_specs=[pl.BlockSpec((TM, K), lambda i: (i, 0)),
                      pl.BlockSpec((K, N), lambda i: (0, 0)),
                      pl.BlockSpec((1, N), lambda i: (0, 0))],
            out_specs=pl.BlockSpec((TM, N), lambda i: (i, 0))),
        compiler_params=pltpu.CompilerParams(
            dimension_semantics=("parallel",)),
    )(a, w, b.reshape(1, N))
    return out[:M] if MP != M else out


# ---------------------------------------------------------------------------
# Kernel 2: conv2 matmul + bias + ReLU + fused per-sample spatial mean,
# gridded over the sample axis.  One sample's patches per grid step.
# ---------------------------------------------------------------------------
def _conv_mean_kernel(a_ref, w_ref, b_ref, o_ref):
    # a_ref: (1, OHW, KP) bf16   w_ref: (KP, CP) bf16   b_ref: (1, CP) f32
    acc = jnp.dot(a_ref[0], w_ref[...],
                  preferred_element_type=jnp.float32)          # (OHW, CP)
    acc = jnp.maximum(acc + b_ref[...], 0.0)
    m = jnp.mean(acc, axis=0, keepdims=True)                   # (1, CP)
    o_ref[...] = m[None, :, :]                                 # (1, 1, CP)


# ---------------------------------------------------------------------------
# Kernel 3: LSTM (PyTorch gate order i, f, g, o) + final Linear, fused.
# Gate/hidden widths padded to GATE_PAD lanes; the (N, feat) matrix is an
# unbatched sequence of length N in PyTorch, so T == N.
# ---------------------------------------------------------------------------
def _lstm_fc_kernel(x_ref, wih_ref, whh_ref, b_ref, fcw_ref, fcb_ref, o_ref,
                    gx_sc, hs_sc, h_sc, c_sc):
    T = x_ref.shape[0]
    hp = whh_ref.shape[0]                     # padded hidden width (128)

    # Hoisted input projection: one dense (T, IN) x (IN, 4*hp) MXU matmul.
    gx_sc[...] = (jnp.dot(x_ref[...], wih_ref[...],
                          preferred_element_type=jnp.float32) + b_ref[...])
    h_sc[...] = jnp.zeros_like(h_sc)
    c_sc[...] = jnp.zeros_like(c_sc)

    def step(t, carry):
        gates = (gx_sc[pl.ds(t, 1), :]
                 + jnp.dot(h_sc[...], whh_ref[...],
                           preferred_element_type=jnp.float32))   # (1, 4*hp)
        i_g = jax.nn.sigmoid(gates[:, 0:hp])
        f_g = jax.nn.sigmoid(gates[:, hp:2 * hp])
        g_g = jnp.tanh(gates[:, 2 * hp:3 * hp])
        o_g = jax.nn.sigmoid(gates[:, 3 * hp:4 * hp])
        c_new = f_g * c_sc[...] + i_g * g_g
        h_new = o_g * jnp.tanh(c_new)
        c_sc[...] = c_new
        h_sc[...] = h_new
        hs_sc[pl.ds(t, 1), :] = h_new
        return carry

    # Fixed moderate unroll (largest of 8/4/2/1 dividing T): rolled loops cost
    # ~35% more per iteration; full unroll of long T would blow code size.
    unroll = next(u for u in (8, 4, 2, 1) if T % u == 0)
    lax.fori_loop(0, T, step, 0, unroll=unroll)

    # Fused FC: single batched, lane-dense (T, OUT_PAD) store.
    o_ref[...] = (jnp.dot(hs_sc[...], fcw_ref[...],
                          preferred_element_type=jnp.float32) + fcb_ref[...])


def lstm_fc(x, w_ih, w_hh, b_ih, b_hh, fc_w, fc_b, hidden):
    # x: (T, INP) lane-padded features; w_ih: (4H, INR); w_hh: (4H, H);
    # fc_w: (C, H)  (PyTorch layouts).
    T, INP = x.shape
    INR = w_ih.shape[1]
    H = hidden
    C = fc_w.shape[0]
    hp = GATE_PAD

    wih_t = w_ih.T                                 # (INR, 4H)
    whh_t = w_hh.T                                 # (H, 4H)
    bias = b_ih + b_hh                             # (4H,)

    # Each gate occupies a full 128-lane block; padded rows/cols/lanes are
    # zero so padded h/c stay exactly zero through the recurrence (with zero
    # initial state), and the lane-padded input features are absorbed by the
    # zero rows INR..INP-1 of wih_p.
    wih_p = jnp.zeros((INP, 4 * hp), jnp.float32)
    whh_p = jnp.zeros((hp, 4 * hp), jnp.float32)
    b_p = jnp.zeros((1, 4 * hp), jnp.float32)
    for g in range(4):
        wih_p = wih_p.at[:INR, g * hp:g * hp + H].set(wih_t[:, g * H:(g + 1) * H])
        whh_p = whh_p.at[:H, g * hp:g * hp + H].set(whh_t[:, g * H:(g + 1) * H])
        b_p = b_p.at[:, g * hp:g * hp + H].set(bias[g * H:(g + 1) * H])

    fcw_p = jnp.zeros((hp, OUT_PAD), jnp.float32).at[:H, :C].set(fc_w.T)
    fcb_p = jnp.zeros((1, OUT_PAD), jnp.float32).at[:, :C].set(fc_b)

    out = pl.pallas_call(
        _lstm_fc_kernel,
        out_shape=jax.ShapeDtypeStruct((T, OUT_PAD), jnp.float32),
        in_specs=[_vmem_spec()] * 6,
        out_specs=_vmem_spec(),
        scratch_shapes=[pltpu.VMEM((T, 4 * hp), jnp.float32),   # gates_x
                        pltpu.VMEM((T, hp), jnp.float32),       # hidden states
                        pltpu.VMEM((1, hp), jnp.float32),       # h
                        pltpu.VMEM((1, hp), jnp.float32)],      # c
    )(x, wih_p, whh_p, b_p, fcw_p, fcb_p)
    return out[:, :C]


# ---------------------------------------------------------------------------
# Glue: channels-last im2col (pure reshapes / static strided slices in JAX).
# ---------------------------------------------------------------------------
def im2col_nhwc(x, k, stride, pad):
    N, H, W, C = x.shape
    xp = jnp.pad(x, ((0, 0), (pad, pad), (pad, pad), (0, 0)))
    OH = (H + 2 * pad - k) // stride + 1
    OW = (W + 2 * pad - k) // stride + 1
    cols = []
    for i in range(k):
        for j in range(k):
            cols.append(xp[:, i:i + stride * OH:stride,
                           j:j + stride * OW:stride, :])
    patches = jnp.stack(cols, axis=3)                  # (N, OH, OW, k*k, C)
    patches = patches.reshape(N * OH * OW, k * k * C)  # (kh, kw, cin) order
    return patches, OH, OW


def _prep_conv_operands(x, w, b, stride, pad, pad_lanes):
    # Returns bf16 patches / weight matrix (K padded to mult of 16), f32 bias,
    # real Cout, spatial dims.  MXU accumulation stays f32 in the kernels.
    Cout, Cin, k, _ = w.shape
    patches, OH, OW = im2col_nhwc(x, k, stride, pad)
    K = Cin * k * k
    KP = _round_up(K, 16)          # bf16 sublane packing of the weight rows
    if KP != K:
        patches = jnp.pad(patches, ((0, 0), (0, KP - K)))
    # (kh, kw, cin) row order to match the patch layout.
    w_mat = w.transpose(2, 3, 1, 0).reshape(K, Cout)
    if KP != K:
        w_mat = jnp.pad(w_mat, ((0, KP - K), (0, 0)))
    CP = _round_up(Cout, 128) if pad_lanes else Cout
    if CP != Cout:
        w_mat = jnp.pad(w_mat, ((0, 0), (0, CP - Cout)))
        b = jnp.pad(b, (0, CP - Cout))
    return patches.astype(jnp.bfloat16), w_mat.astype(jnp.bfloat16), b, Cout, OH, OW


def conv2d_relu_nhwc(x, w, b, stride=2, pad=2):
    # nn.Conv2d(Cin, Cout, 5, stride=2, padding=2) + ReLU, channels-last.
    # Output emitted at native Cout width (no lane-pad writeback).
    N = x.shape[0]
    patches, w_mat, b_f, Cout, OH, OW = _prep_conv_operands(
        x, w, b, stride, pad, pad_lanes=False)
    out = matmul_bias_relu(patches, w_mat, b_f)        # (N*OH*OW, Cout) f32
    return out.reshape(N, OH, OW, Cout)                # stays NHWC


def conv2d_relu_mean(x, w, b, stride=2, pad=2):
    # conv + ReLU + per-sample spatial mean, fused; gridded over samples.
    # Emits a lane-dense (N, FEAT_PAD) slab (padded lanes exactly zero).
    N = x.shape[0]
    patches, w_mat, b_p, Cout, OH, OW = _prep_conv_operands(
        x, w, b, stride, pad, pad_lanes=True)
    KP = w_mat.shape[0]
    CP = w_mat.shape[1]
    ohw = OH * OW
    patches3 = patches.reshape(N, ohw, KP)
    out = pl.pallas_call(
        _conv_mean_kernel,
        out_shape=jax.ShapeDtypeStruct((N, 1, CP), jnp.float32),
        grid_spec=pltpu.PrefetchScalarGridSpec(
            num_scalar_prefetch=0,
            grid=(N,),
            in_specs=[pl.BlockSpec((1, ohw, KP), lambda n: (n, 0, 0)),
                      pl.BlockSpec((KP, CP), lambda n: (0, 0)),
                      pl.BlockSpec((1, CP), lambda n: (0, 0))],
            out_specs=pl.BlockSpec((1, 1, CP), lambda n: (n, 0, 0))),
        compiler_params=pltpu.CompilerParams(
            dimension_semantics=("parallel",)),
    )(patches3, w_mat, b_p.reshape(1, CP))
    return out.reshape(N, CP)                           # (N, 128), lanes>=Cout are 0


# ---------------------------------------------------------------------------
# Full forward pass.
# ---------------------------------------------------------------------------
def crnn_forward(params, x):
    # x: (N, H, W)  ->  PyTorch: x.unsqueeze(1); here channels-last (N, H, W, 1)
    x = x[:, :, :, None]
    x = conv2d_relu_nhwc(x, params["conv1_w"], params["conv1_b"])     # (N,H/2,W/2,16)
    feat = conv2d_relu_mean(x, params["conv2_w"], params["conv2_b"])  # (N, 128) lane-padded
    # TODO(synk): the PyTorch module declares LSTM input_size=2048, but the
    # forward actually feeds 64-dim features (would raise at runtime in torch);
    # we implement the runtime-consistent input_size=64 (lane-padded to 128).
    logits = lstm_fc(feat, params["lstm_w_ih"], params["lstm_w_hh"],
                     params["lstm_b_ih"], params["lstm_b_hh"],
                     params["fc_w"], params["fc_b"], hidden=HIDDEN)
    return logits                                                     # (N, num_classes)


def init_params(key, num_classes):
    ks = jax.random.split(key, 10)

    def rnd(k, shape, scale):
        return jax.random.normal(k, shape, jnp.float32) * scale

    H = HIDDEN
    return dict(
        conv1_w=rnd(ks[0], (16, 1, 5, 5), 0.2),
        conv1_b=rnd(ks[1], (16,), 0.1),
        conv2_w=rnd(ks[2], (64, 16, 5, 5), 0.05),
        conv2_b=rnd(ks[3], (64,), 0.1),
        lstm_w_ih=rnd(ks[4], (4 * H, 64), 0.1),
        lstm_w_hh=rnd(ks[5], (4 * H, H), 0.1),
        lstm_b_ih=rnd(ks[6], (4 * H,), 0.1),
        lstm_b_hh=rnd(ks[7], (4 * H,), 0.1),
        fc_w=rnd(ks[8], (num_classes, H), 0.1),
        fc_b=rnd(ks[9], (num_classes,), 0.1),
    )


if __name__ == "__main__":
    key = jax.random.PRNGKey(0)
    pkey, xkey = jax.random.split(key)
    params = init_params(pkey, NUM_CLASSES)
    x = jax.random.normal(xkey, (2, 16, 16), jnp.float32)   # (N, H, W)

    out = jax.jit(crnn_forward)(params, x)
    out = jax.block_until_ready(out)
    assert out.shape == (2, NUM_CLASSES), out.shape
    assert bool(jnp.all(jnp.isfinite(out)))
    print("KERNEL_OK")
</pallas_src>

<mosaic_0001>
module attributes {stable_mosaic.version = 11 : i64} {
  func.func @_matmul_bias_relu_kernel(%arg0: i32, %arg1: memref<128x32xbf16, #tpu.memory_space<vmem>>, %arg2: memref<32x16xbf16, #tpu.memory_space<vmem>>, %arg3: memref<1x16xf32, #tpu.memory_space<vmem>>, %arg4: memref<128x16xf32, #tpu.memory_space<vmem>>) attributes {dimension_semantics = [#tpu.dimension_semantics<parallel>], iteration_bounds = array<i64: 1>, scalar_prefetch = 0 : i64, scratch_operands = 0 : i64, tpu.core_type = #tpu.core_type<tc>, window_params = [{transform_indices = @transform_0, window_bounds = array<i64: 128, 32>}, {pipeline_mode = #tpu.pipeline_mode<synchronous>, transform_indices = @transform_1, window_bounds = array<i64: 32, 16>}, {pipeline_mode = #tpu.pipeline_mode<synchronous>, transform_indices = @transform_2, window_bounds = array<i64: 1, 16>}, {transform_indices = @transform_3, window_bounds = array<i64: 128, 16>}]} {
    %c0 = arith.constant 0 : index
    %c0_0 = arith.constant 0 : index
    %0 = vector.load %arg1[%c0, %c0_0] : memref<128x32xbf16, #tpu.memory_space<vmem>>, vector<128x32xbf16>
    %c0_1 = arith.constant 0 : index
    %c0_2 = arith.constant 0 : index
    %1 = vector.load %arg2[%c0_1, %c0_2] : memref<32x16xbf16, #tpu.memory_space<vmem>>, vector<32x16xbf16>
    %cst = arith.constant dense<0.000000e+00> : vector<128x16xf32>
    %2 = tpu.matmul %0, %1, %cst {dimension_numbers = #tpu.dot_dimension_numbers<[1], [0], [0], [1], [0, 0, 1, 1], [], []>} : vector<128x32xbf16>, vector<32x16xbf16>, vector<128x16xf32> -> vector<128x16xf32>
    %c0_3 = arith.constant 0 : index
    %c0_4 = arith.constant 0 : index
    %3 = vector.load %arg3[%c0_3, %c0_4] : memref<1x16xf32, #tpu.memory_space<vmem>>, vector<1x16xf32>
    %4 = vector.broadcast %3 : vector<1x16xf32> to vector<128x16xf32>
    %5 = arith.addf %2, %4 : vector<128x16xf32>
    %cst_5 = arith.constant 0.000000e+00 : f32
    %6 = vector.broadcast %cst_5 : f32 to vector<128x16xf32>
    %7 = arith.maximumf %5, %6 : vector<128x16xf32>
    %c0_6 = arith.constant 0 : index
    %c0_7 = arith.constant 0 : index
    %8 = vector.load %arg4[%c0_6, %c0_7] : memref<128x16xf32, #tpu.memory_space<vmem>>, vector<128x16xf32>
    tpu.vector_store %arg4[%c0_6, %c0_7], %7 {strides = array<i32>} : memref<128x16xf32, #tpu.memory_space<vmem>>, vector<128x16xf32>,
    return
  }
  func.func @transform_0(%arg0: i32) -> (i32, i32) {
    %c0_i32 = arith.constant 0 : i32
    %c0_i32_0 = arith.constant 0 : i32
    return %arg0, %c0_i32 : i32, i32
  }
  func.func @transform_1(%arg0: i32) -> (i32, i32) {
    %c0_i32 = arith.constant 0 : i32
    %c0_i32_0 = arith.constant 0 : i32
    %c0_i32_1 = arith.constant 0 : i32
    return %c0_i32, %c0_i32_0 : i32, i32
  }
  func.func @transform_2(%arg0: i32) -> (i32, i32) {
    %c0_i32 = arith.constant 0 : i32
    %c0_i32_0 = arith.constant 0 : i32
    %c0_i32_1 = arith.constant 0 : i32
    return %c0_i32, %c0_i32_0 : i32, i32
  }
  func.func @transform_3(%arg0: i32) -> (i32, i32) {
    %c0_i32 = arith.constant 0 : i32
    %c0_i32_0 = arith.constant 0 : i32
    return %arg0, %c0_i32 : i32, i32
  }
}

module attributes {stable_mosaic.version = 11 : i64} {
  func.func @_conv_mean_kernel(%arg0: i32, %arg1: memref<1x16x400xbf16, #tpu.memory_space<vmem>>, %arg2: memref<400x128xbf16, #tpu.memory_space<vmem>>, %arg3: memref<1x128xf32, #tpu.memory_space<vmem>>, %arg4: memref<1x1x128xf32, #tpu.memory_space<vmem>>) attributes {dimension_semantics = [#tpu.dimension_semantics<parallel>], iteration_bounds = array<i64: 2>, scalar_prefetch = 0 : i64, scratch_operands = 0 : i64, tpu.core_type = #tpu.core_type<tc>, window_params = [{transform_indices = @transform_0, window_bounds = array<i64: 1, 16, 400>}, {pipeline_mode = #tpu.pipeline_mode<synchronous>, transform_indices = @transform_1, window_bounds = array<i64: 400, 128>}, {pipeline_mode = #tpu.pipeline_mode<synchronous>, transform_indices = @transform_2, window_bounds = array<i64: 1, 128>}, {transform_indices = @transform_3, window_bounds = array<i64: 1, 1, 128>}]} {
    %c0 = arith.constant 0 : index
    %c0_0 = arith.constant 0 : index
    %c0_1 = arith.constant 0 : index
    %0 = vector.load %arg1[%c0, %c0_0, %c0_1] : memref<1x16x400xbf16, #tpu.memory_space<vmem>>, vector<1x16x400xbf16>
    %1 = vector.shape_cast %0 : vector<1x16x400xbf16> to vector<16x400xbf16>
    %c0_2 = arith.constant 0 : index
    %c0_3 = arith.constant 0 : index
    %2 = vector.load %arg2[%c0_2, %c0_3] : memref<400x128xbf16, #tpu.memory_space<vmem>>, vector<400x128xbf16>
    %cst = arith.constant dense<0.000000e+00> : vector<16x128xf32>
    %3 = tpu.matmul %1, %2, %cst {dimension_numbers = #tpu.dot_dimension_numbers<[1], [0], [0], [1], [0, 0, 1, 1], [], []>} : vector<16x400xbf16>, vector<400x128xbf16>, vector<16x128xf32> -> vector<16x128xf32>
    %c0_4 = arith.constant 0 : index
    %c0_5 = arith.constant 0 : index
    %4 = vector.load %arg3[%c0_4, %c0_5] : memref<1x128xf32, #tpu.memory_space<vmem>>, vector<1x128xf32>
    %5 = vector.broadcast %4 : vector<1x128xf32> to vector<16x128xf32>
    %6 = arith.addf %3, %5 : vector<16x128xf32>
    %cst_6 = arith.constant 0.000000e+00 : f32
    %7 = vector.broadcast %cst_6 : f32 to vector<16x128xf32>
    %8 = arith.maximumf %6, %7 : vector<16x128xf32>
    %cst_7 = arith.constant dense<0.000000e+00> : vector<128xf32>
    %9 = vector.multi_reduction <add>, %8, %cst_7 [0] : vector<16x128xf32> to vector<128xf32>
    %10 = vector.shape_cast %9 : vector<128xf32> to vector<1x128xf32>
    %cst_8 = arith.constant 1.600000e+01 : f32
    %11 = vector.broadcast %cst_8 : f32 to vector<1x128xf32>
    %12 = arith.divf %10, %11 : vector<1x128xf32>
    %13 = vector.shape_cast %12 : vector<1x128xf32> to vector<1x1x128xf32>
    %c0_9 = arith.constant 0 : index
    %c0_10 = arith.constant 0 : index
    %c0_11 = arith.constant 0 : index
    %14 = vector.load %arg4[%c0_9, %c0_10, %c0_11] : memref<1x1x128xf32, #tpu.memory_space<vmem>>, vector<1x1x128xf32>
    tpu.vector_store %arg4[%c0_9, %c0_10, %c0_11], %13 {strides = array<i32>} : memref<1x1x128xf32, #tpu.memory_space<vmem>>, vector<1x1x128xf32>,
    return
  }
  func.func @transform_0(%arg0: i32) -> (i32, i32, i32) {
    %c0_i32 = arith.constant 0 : i32
    %c0_i32_0 = arith.constant 0 : i32
    %c0_i32_1 = arith.constant 0 : i32
    return %arg0, %c0_i32, %c0_i32_0 : i32, i32, i32
  }
  func.func @transform_1(%arg0: i32) -> (i32, i32) {
    %c0_i32 = arith.constant 0 : i32
    %c0_i32_0 = arith.constant 0 : i32
    %c0_i32_1 = arith.constant 0 : i32
    return %c0_i32, %c0_i32_0 : i32, i32
  }
  func.func @transform_2(%arg0: i32) -> (i32, i32) {
    %c0_i32 = arith.constant 0 : i32
    %c0_i32_0 = arith.constant 0 : i32
    %c0_i32_1 = arith.constant 0 : i32
    return %c0_i32, %c0_i32_0 : i32, i32
  }
  func.func @transform_3(%arg0: i32) -> (i32, i32, i32) {
    %c0_i32 = arith.constant 0 : i32
    %c0_i32_0 = arith.constant 0 : i32
    %c0_i32_1 = arith.constant 0 : i32
    return %arg0, %c0_i32, %c0_i32_0 : i32, i32, i32
  }
}

module attributes {stable_mosaic.version = 11 : i64} {
  func.func @_lstm_fc_kernel(%arg0: memref<2x128xf32, #tpu.memory_space<vmem>>, %arg1: memref<128x512xf32, #tpu.memory_space<vmem>>, %arg2: memref<128x512xf32, #tpu.memory_space<vmem>>, %arg3: memref<1x512xf32, #tpu.memory_space<vmem>>, %arg4: memref<128x128xf32, #tpu.memory_space<vmem>>, %arg5: memref<1x128xf32, #tpu.memory_space<vmem>>, %arg6: memref<2x128xf32, #tpu.memory_space<vmem>>, %arg7: memref<2x512xf32, #tpu.memory_space<vmem>>, %arg8: memref<2x128xf32, #tpu.memory_space<vmem>>, %arg9: memref<1x128xf32, #tpu.memory_space<vmem>>, %arg10: memref<1x128xf32, #tpu.memory_space<vmem>>) attributes {dimension_semantics = [], scalar_prefetch = 0 : i64, scratch_operands = 4 : i64, tpu.core_type = #tpu.core_type<tc>} {
    %c0 = arith.constant 0 : index
    %c0_0 = arith.constant 0 : index
    %0 = vector.load %arg0[%c0, %c0_0] : memref<2x128xf32, #tpu.memory_space<vmem>>, vector<2x128xf32>
    %c0_1 = arith.constant 0 : index
    %c0_2 = arith.constant 0 : index
    %1 = vector.load %arg1[%c0_1, %c0_2] : memref<128x512xf32, #tpu.memory_space<vmem>>, vector<128x512xf32>
    %cst = arith.constant dense<0.000000e+00> : vector<2x512xf32>
    %2 = tpu.matmul %0, %1, %cst {dimension_numbers = #tpu.dot_dimension_numbers<[1], [0], [0], [1], [0, 0, 1, 1], [], []>} : vector<2x128xf32>, vector<128x512xf32>, vector<2x512xf32> -> vector<2x512xf32>
    %c0_3 = arith.constant 0 : index
    %c0_4 = arith.constant 0 : index
    %3 = vector.load %arg3[%c0_3, %c0_4] : memref<1x512xf32, #tpu.memory_space<vmem>>, vector<1x512xf32>
    %4 = vector.broadcast %3 : vector<1x512xf32> to vector<2x512xf32>
    %5 = arith.addf %2, %4 : vector<2x512xf32>
    %c0_5 = arith.constant 0 : index
    %c0_6 = arith.constant 0 : index
    %6 = vector.load %arg7[%c0_5, %c0_6] : memref<2x512xf32, #tpu.memory_space<vmem>>, vector<2x512xf32>
    tpu.vector_store %arg7[%c0_5, %c0_6], %5 {strides = array<i32>} : memref<2x512xf32, #tpu.memory_space<vmem>>, vector<2x512xf32>,
    %cst_7 = arith.constant 0.000000e+00 : f32
    %7 = vector.broadcast %cst_7 : f32 to vector<1x128xf32>
    %c0_8 = arith.constant 0 : index
    %c0_9 = arith.constant 0 : index
    %8 = vector.load %arg9[%c0_8, %c0_9] : memref<1x128xf32, #tpu.memory_space<vmem>>, vector<1x128xf32>
    tpu.vector_store %arg9[%c0_8, %c0_9], %7 {strides = array<i32>} : memref<1x128xf32, #tpu.memory_space<vmem>>, vector<1x128xf32>,
    %cst_10 = arith.constant 0.000000e+00 : f32
    %9 = vector.broadcast %cst_10 : f32 to vector<1x128xf32>
    %c0_11 = arith.constant 0 : index
    %c0_12 = arith.constant 0 : index
    %10 = vector.load %arg10[%c0_11, %c0_12] : memref<1x128xf32, #tpu.memory_space<vmem>>, vector<1x128xf32>
    tpu.vector_store %arg10[%c0_11, %c0_12], %9 {strides = array<i32>} : memref<1x128xf32, #tpu.memory_space<vmem>>, vector<1x128xf32>,
    %c0_i32 = arith.constant 0 : i32
    %11 = arith.index_cast %c0_i32 : i32 to index
    %c0_13 = arith.constant 0 : index
    %12 = vector.load %arg7[%11, %c0_13] : memref<2x512xf32, #tpu.memory_space<vmem>>, vector<1x512xf32>
    %c0_14 = arith.constant 0 : index
    %c0_15 = arith.constant 0 : index
    %13 = vector.load %arg9[%c0_14, %c0_15] : memref<1x128xf32, #tpu.memory_space<vmem>>, vector<1x128xf32>
    %c0_16 = arith.constant 0 : index
    %c0_17 = arith.constant 0 : index
    %14 = vector.load %arg2[%c0_16, %c0_17] : memref<128x512xf32, #tpu.memory_space<vmem>>, vector<128x512xf32>
    %cst_18 = arith.constant dense<0.000000e+00> : vector<1x512xf32>
    %15 = tpu.matmul %13, %14, %cst_18 {dimension_numbers = #tpu.dot_dimension_numbers<[1], [0], [0], [1], [0, 0, 1, 1], [], []>} : vector<1x128xf32>, vector<128x512xf32>, vector<1x512xf32> -> vector<1x512xf32>
    %16 = arith.addf %12, %15 : vector<1x512xf32>
    %17 = vector.extract_strided_slice %16 {offsets = [0, 0], sizes = [1, 128], strides = [1, 1]} : vector<1x512xf32> to vector<1x128xf32>
    %18 = arith.negf %17 : vector<1x128xf32>
    %19 = math.exp %18 : vector<1x128xf32>
    %cst_19 = arith.constant 1.000000e+00 : f32
    %20 = vector.broadcast %cst_19 : f32 to vector<1x128xf32>
    %21 = arith.addf %20, %19 : vector<1x128xf32>
    %22 = arith.divf %20, %21 : vector<1x128xf32>
    %23 = vector.extract_strided_slice %16 {offsets = [0, 128], sizes = [1, 128], strides = [1, 1]} : vector<1x512xf32> to vector<1x128xf32>
    %24 = arith.negf %23 : vector<1x128xf32>
    %25 = math.exp %24 : vector<1x128xf32>
    %cst_20 = arith.constant 1.000000e+00 : f32
    %26 = vector.broadcast %cst_20 : f32 to vector<1x128xf32>
    %27 = arith.addf %26, %25 : vector<1x128xf32>
    %28 = arith.divf %26, %27 : vector<1x128xf32>
    %29 = vector.extract_strided_slice %16 {offsets = [0, 256], sizes = [1, 128], strides = [1, 1]} : vector<1x512xf32> to vector<1x128xf32>
    %30 = math.tanh %29 : vector<1x128xf32>
    %31 = vector.extract_strided_slice %16 {offsets = [0, 384], sizes = [1, 128], strides = [1, 1]} : vector<1x512xf32> to vector<1x128xf32>
    %32 = arith.negf %31 : vector<1x128xf32>
    %33 = math.exp %32 : vector<1x128xf32>
    %cst_21 = arith.constant 1.000000e+00 : f32
    %34 = vector.broadcast %cst_21 : f32 to vector<1x128xf32>
    %35 = arith.addf %34, %33 : vector<1x128xf32>
    %36 = arith.divf %34, %35 : vector<1x128xf32>
    %c0_22 = arith.constant 0 : index
    %c0_23 = arith.constant 0 : index
    %37 = vector.load %arg10[%c0_22, %c0_23] : memref<1x128xf32, #tpu.memory_space<vmem>>, vector<1x128xf32>
    %38 = arith.mulf %28, %37 : vector<1x128xf32>
    %39 = arith.mulf %22, %30 : vector<1x128xf32>
    %40 = arith.addf %38, %39 : vector<1x128xf32>
    %41 = math.tanh %40 : vector<1x128xf32>
    %42 = arith.mulf %36, %41 : vector<1x128xf32>
    %c0_24 = arith.constant 0 : index
    %c0_25 = arith.constant 0 : index
    %43 = vector.load %arg10[%c0_24, %c0_25] : memref<1x128xf32, #tpu.memory_space<vmem>>, vector<1x128xf32>
    tpu.vector_store %arg10[%c0_24, %c0_25], %40 {strides = array<i32>} : memref<1x128xf32, #tpu.memory_space<vmem>>, vector<1x128xf32>,
    %c0_26 = arith.constant 0 : index
    %c0_27 = arith.constant 0 : index
    %44 = vector.load %arg9[%c0_26, %c0_27] : memref<1x128xf32, #tpu.memory_space<vmem>>, vector<1x128xf32>
    tpu.vector_store %arg9[%c0_26, %c0_27], %42 {strides = array<i32>} : memref<1x128xf32, #tpu.memory_space<vmem>>, vector<1x128xf32>,
    %45 = arith.index_cast %c0_i32 : i32 to index
    %c0_28 = arith.constant 0 : index
    %46 = vector.load %arg8[%45, %c0_28] : memref<2x128xf32, #tpu.memory_space<vmem>>, vector<1x128xf32>
    tpu.vector_store %arg8[%45, %c0_28], %42 {strides = array<i32>} : memref<2x128xf32, #tpu.memory_space<vmem>>, vector<1x128xf32>,
    %c1_i32 = arith.constant 1 : i32
    %47 = arith.index_cast %c1_i32 : i32 to index
    %c0_29 = arith.constant 0 : index
    %48 = vector.load %arg7[%47, %c0_29] : memref<2x512xf32, #tpu.memory_space<vmem>>, vector<1x512xf32>
    %c0_30 = arith.constant 0 : index
    %c0_31 = arith.constant 0 : index
    %49 = vector.load %arg9[%c0_30, %c0_31] : memref<1x128xf32, #tpu.memory_space<vmem>>, vector<1x128xf32>
    %c0_32 = arith.constant 0 : index
    %c0_33 = arith.constant 0 : index
    %50 = vector.load %arg2[%c0_32, %c0_33] : memref<128x512xf32, #tpu.memory_space<vmem>>, vector<128x512xf32>
    %cst_34 = arith.constant dense<0.000000e+00> : vector<1x512xf32>
    %51 = tpu.matmul %49, %50, %cst_34 {dimension_numbers = #tpu.dot_dimension_numbers<[1], [0], [0], [1], [0, 0, 1, 1], [], []>} : vector<1x128xf32>, vector<128x512xf32>, vector<1x512xf32> -> vector<1x512xf32>
    %52 = arith.addf %48, %51 : vector<1x512xf32>
    %53 = vector.extract_strided_slice %52 {offsets = [0, 0], sizes = [1, 128], strides = [1, 1]} : vector<1x512xf32> to vector<1x128xf32>
    %54 = arith.negf %53 : vector<1x128xf32>
    %55 = math.exp %54 : vector<1x128xf32>
    %cst_35 = arith.constant 1.000000e+00 : f32
    %56 = vector.broadcast %cst_35 : f32 to vector<1x128xf32>
    %57 = arith.addf %56, %55 : vector<1x128xf32>
    %58 = arith.divf %56, %57 : vector<1x128xf32>
    %59 = vector.extract_strided_slice %52 {offsets = [0, 128], sizes = [1, 128], strides = [1, 1]} : vector<1x512xf32> to vector<1x128xf32>
    %60 = arith.negf %59 : vector<1x128xf32>
    %61 = math.exp %60 : vector<1x128xf32>
    %cst_36 = arith.constant 1.000000e+00 : f32
    %62 = vector.broadcast %cst_36 : f32 to vector<1x128xf32>
    %63 = arith.addf %62, %61 : vector<1x128xf32>
    %64 = arith.divf %62, %63 : vector<1x128xf32>
    %65 = vector.extract_strided_slice %52 {offsets = [0, 256], sizes = [1, 128], strides = [1, 1]} : vector<1x512xf32> to vector<1x128xf32>
    %66 = math.tanh %65 : vector<1x128xf32>
    %67 = vector.extract_strided_slice %52 {offsets = [0, 384], sizes = [1, 128], strides = [1, 1]} : vector<1x512xf32> to vector<1x128xf32>
    %68 = arith.negf %67 : vector<1x128xf32>
    %69 = math.exp %68 : vector<1x128xf32>
    %cst_37 = arith.constant 1.000000e+00 : f32
    %70 = vector.broadcast %cst_37 : f32 to vector<1x128xf32>
    %71 = arith.addf %70, %69 : vector<1x128xf32>
    %72 = arith.divf %70, %71 : vector<1x128xf32>
    %c0_38 = arith.constant 0 : index
    %c0_39 = arith.constant 0 : index
    %73 = vector.load %arg10[%c0_38, %c0_39] : memref<1x128xf32, #tpu.memory_space<vmem>>, vector<1x128xf32>
    %74 = arith.mulf %64, %73 : vector<1x128xf32>
    %75 = arith.mulf %58, %66 : vector<1x128xf32>
    %76 = arith.addf %74, %75 : vector<1x128xf32>
    %77 = math.tanh %76 : vector<1x128xf32>
    %78 = arith.mulf %72, %77 : vector<1x128xf32>
    %c0_40 = arith.constant 0 : index
    %c0_41 = arith.constant 0 : index
    %79 = vector.load %arg10[%c0_40, %c0_41] : memref<1x128xf32, #tpu.memory_space<vmem>>, vector<1x128xf32>
    tpu.vector_store %arg10[%c0_40, %c0_41], %76 {strides = array<i32>} : memref<1x128xf32, #tpu.memory_space<vmem>>, vector<1x128xf32>,
    %c0_42 = arith.constant 0 : index
    %c0_43 = arith.constant 0 : index
    %80 = vector.load %arg9[%c0_42, %c0_43] : memref<1x128xf32, #tpu.memory_space<vmem>>, vector<1x128xf32>
    tpu.vector_store %arg9[%c0_42, %c0_43], %78 {strides = array<i32>} : memref<1x128xf32, #tpu.memory_space<vmem>>, vector<1x128xf32>,
    %81 = arith.index_cast %c1_i32 : i32 to index
    %c0_44 = arith.constant 0 : index
    %82 = vector.load %arg8[%81, %c0_44] : memref<2x128xf32, #tpu.memory_space<vmem>>, vector<1x128xf32>
    tpu.vector_store %arg8[%81, %c0_44], %78 {strides = array<i32>} : memref<2x128xf32, #tpu.memory_space<vmem>>, vector<1x128xf32>,
    %c2_i32 = arith.constant 2 : i32
    %c0_45 = arith.constant 0 : index
    %c0_46 = arith.constant 0 : index
    %83 = vector.load %arg8[%c0_45, %c0_46] : memref<2x128xf32, #tpu.memory_space<vmem>>, vector<2x128xf32>
    %c0_47 = arith.constant 0 : index
    %c0_48 = arith.constant 0 : index
    %84 = vector.load %arg4[%c0_47, %c0_48] : memref<128x128xf32, #tpu.memory_space<vmem>>, vector<128x128xf32>
    %cst_49 = arith.constant dense<0.000000e+00> : vector<2x128xf32>
    %85 = tpu.matmul %83, %84, %cst_49 {dimension_numbers = #tpu.dot_dimension_numbers<[1], [0], [0], [1], [0, 0, 1, 1], [], []>} : vector<2x128xf32>, vector<128x128xf32>, vector<2x128xf32> -> vector<2x128xf32>
    %c0_50 = arith.constant 0 : index
    %c0_51 = arith.constant 0 : index
    %86 = vector.load %arg5[%c0_50, %c0_51] : memref<1x128xf32, #tpu.memory_space<vmem>>, vector<1x128xf32>
    %87 = vector.broadcast %86 : vector<1x128xf32> to vector<2x128xf32>
    %88 = arith.addf %85, %87 : vector<2x128xf32>
    %c0_52 = arith.constant 0 : index
    %c0_53 = arith.constant 0 : index
    %89 = vector.load %arg6[%c0_52, %c0_53] : memref<2x128xf32, #tpu.memory_space<vmem>>, vector<2x128xf32>
    tpu.vector_store %arg6[%c0_52, %c0_53], %88 {strides = array<i32>} : memref<2x128xf32, #tpu.memory_space<vmem>>, vector<2x128xf32>,
    return
  }
}

</mosaic_0001>

<llo_original>
// kernel: crnn_forward.3
$region0: #{crnn_forward.3}
  #allocation0 [shape = 'u32[]', space=smem, size = 0x4, offset = 0x4, fixed_abs, tag = 'smem constant byte address 0x4 - core index']
  #allocation1 [shape = 'u32[72,128]{1,0:T(1,128)}', space=vmem, size = 0x9000, scoped, tag = 'internal scratch']
  %s0 = inlined_call_operand.vmem [shape: bf16[128,32], index: 0, kind: input, shape index: {}]
  %s1 = inlined_call_operand.vmem [shape: bf16[32,16], index: 1, kind: input, shape index: {}]
  %s2 = inlined_call_operand.vmem [shape: f32[1,16], index: 2, kind: input, shape index: {}]
  %s3 = inlined_call_operand.vmem [shape: f32[128,16], index: 3, kind: output, shape index: {}]
  %s4 = sld [smem:[#allocation0]]
  $region22: #{crnn_forward.3} parent=0
    _
  %s6 = ssub.s32 1, %s4
  %s7 = scalar_select 0, %s6, %s4
  // Predicated region
  $region2: #{crnn_forward.3} parent=0 // pred_check
    _
  $region3: #{crnn_forward.3} parent=0 // pred_check_branch
    %9 = sbr.rel (0) target = $region5
  $region4: #{crnn_forward.3} parent=0 // pred_region
    _
  $region5: #{crnn_forward.3} parent=0 // pred_fallthru
    _
  // Predicated region
  $region6: #{crnn_forward.3} parent=0 // pred_check
    _
  $region7: #{crnn_forward.3} parent=0 // pred_check_branch
    %11 = sbr.rel (0) target = $region9
  $region8: #{crnn_forward.3} parent=0 // pred_region
    _
  $region9: #{crnn_forward.3} parent=0 // pred_fallthru
    _
  // Predicated region
  $region10: #{crnn_forward.3} parent=0 // pred_check
    _
  $region11: #{crnn_forward.3} parent=0 // pred_check_branch
    %13 = sbr.rel (0) target = $region13
  $region12: #{crnn_forward.3} parent=0 // pred_region
    _
  $region13: #{crnn_forward.3} parent=0 // pred_fallthru
    _
  %v15 = vld [vmem:[%s0] sm:$0xf]
  %v16 = vld [vmem:[%s0 + $0x4] sm:$0xf]
  %v17 = vld [vmem:[%s0 + $0x8] sm:$0xf]
  %v18 = vld [vmem:[%s0 + $0xc] sm:$0xf]
  %v19 = vld [vmem:[%s0 + $0x10] sm:$0xf]
  %v20 = vld [vmem:[%s0 + $0x14] sm:$0xf]
  %v21 = vld [vmem:[%s0 + $0x18] sm:$0xf]
  %v22 = vld [vmem:[%s0 + $0x1c] sm:$0xf]
  %v23 = vld [vmem:[%s0 + $0x20] sm:$0xf]
  %v24 = vld [vmem:[%s0 + $0x24] sm:$0xf]
  %v25 = vld [vmem:[%s0 + $0x28] sm:$0xf]
  %v26 = vld [vmem:[%s0 + $0x2c] sm:$0xf]
  %v27 = vld [vmem:[%s0 + $0x30] sm:$0xf]
  %v28 = vld [vmem:[%s0 + $0x34] sm:$0xf]
  %v29 = vld [vmem:[%s0 + $0x38] sm:$0xf]
  %v30 = vld [vmem:[%s0 + $0x3c] sm:$0xf]
  %v31 = vld [vmem:[%s1] sm:$0xf]
  %v32 = vld [vmem:[%s1 + $0x4] sm:$0xf]
  %v33 = vld [vmem:[%s1 + $0x8] sm:$0xf]
  %v34 = vld [vmem:[%s1 + $0xc] sm:$0xf]
  %v35 = vld [vmem:[%s2] sm:$0x1]
  %v37 = vperm.slane %v35, 0
  %v55 = vunpack.c.l.b16 %v15
  %v56 = vunpack.c.l.b16 %v16
  %v57 = vunpack.c.l.b16 %v17
  %v58 = vunpack.c.l.b16 %v18
  %v59 = vunpack.c.l.b16 %v19
  %v60 = vunpack.c.l.b16 %v20
  %v61 = vunpack.c.l.b16 %v21
  %v62 = vunpack.c.l.b16 %v22
  %v63 = vunpack.c.l.b16 %v23
  %v64 = vunpack.c.l.b16 %v24
  %v65 = vunpack.c.l.b16 %v25
  %v66 = vunpack.c.l.b16 %v26
  %v67 = vunpack.c.l.b16 %v27
  %v68 = vunpack.c.l.b16 %v28
  %v69 = vunpack.c.l.b16 %v29
  %v70 = vunpack.c.l.b16 %v30
  %v71 = vpack.c.b16 %v56, %v55
  %v72 = vpack.c.b16 %v58, %v57
  %v73 = vpack.c.b16 %v60, %v59
  %v74 = vpack.c.b16 %v62, %v61
  %v75 = vpack.c.b16 %v64, %v63
  %v76 = vpack.c.b16 %v66, %v65
  %v77 = vpack.c.b16 %v68, %v67
  %v78 = vpack.c.b16 %v70, %v69
  %v83 = vunpack.c.l.b16 %v31
  %v84 = vunpack.c.l.b16 %v32
  %v85 = vunpack.c.l.b16 %v33
  %v86 = vunpack.c.l.b16 %v34
  %v87 = vpack.c.b16 %v84, %v83
  %v88 = vpack.c.b16 %v86, %v85
  %vm91 = vcmask 261120
  %v93 = vsel %vm91, %v71, 0
  %v96 = vsel %vm91, %v72, 0
  %v99 = vsel %vm91, %v73, 0
  %v102 = vsel %vm91, %v74, 0
  %v105 = vsel %vm91, %v75, 0
  %v108 = vsel %vm91, %v76, 0
  %v111 = vsel %vm91, %v77, 0
  %v114 = vsel %vm91, %v78, 0
  %116 = vmatpush.bf16.msra.mxu0 0
  %117 = vmatpush.bf16.msra.mxu0 0
  %118 = vmatpush.bf16.msra.mxu0 0
  %119 = vmatpush.bf16.msra.mxu0 0
  %120 = vmatpush.bf16.msra.mxu0 0
  %121 = vmatpush.bf16.msra.mxu0 0
  %122 = vmatpush.bf16.msra.mxu0 %v88
  %123 = vmatpush.bf16.msra.mxu0 %v87
  %124 = vmatmul.bf16.gmra.mxu0 %v93
  %v125 = vpop.f32.mrf.mxu0
  %v126 = vadd.f32 %v37, %v125
  %v127 = vpop.f32.mrf.mxu0
  %v128 = vadd.f32 %v37, %v127
  %129 = vmatmul.bf16.gmra.mxu0 %v96
  %v130 = vpop.f32.mrf.mxu0
  %v131 = vadd.f32 %v37, %v130
  %v132 = vpop.f32.mrf.mxu0
  %v133 = vadd.f32 %v37, %v132
  %134 = vmatmul.bf16.gmra.mxu0 %v99
  %v135 = vpop.f32.mrf.mxu0
  %v136 = vadd.f32 %v37, %v135
  %v137 = vpop.f32.mrf.mxu0
  %v138 = vadd.f32 %v37, %v137
  %139 = vmatmul.bf16.gmra.mxu0 %v102
  %v140 = vpop.f32.mrf.mxu0
  %v141 = vadd.f32 %v37, %v140
  %v142 = vpop.f32.mrf.mxu0
  %v143 = vadd.f32 %v37, %v142
  %144 = vmatmul.bf16.gmra.mxu0 %v105
  %v145 = vpop.f32.mrf.mxu0
  %v146 = vadd.f32 %v37, %v145
  %v147 = vpop.f32.mrf.mxu0
  %v148 = vadd.f32 %v37, %v147
  %149 = vmatmul.bf16.gmra.mxu0 %v108
  %v150 = vpop.f32.mrf.mxu0
  %v151 = vadd.f32 %v37, %v150
  %v152 = vpop.f32.mrf.mxu0
  %v153 = vadd.f32 %v37, %v152
  %154 = vmatmul.bf16.gmra.mxu0 %v111
  %v155 = vpop.f32.mrf.mxu0
  %v156 = vadd.f32 %v37, %v155
  %v157 = vpop.f32.mrf.mxu0
  %v158 = vadd.f32 %v37, %v157
  %159 = vmatmul.bf16.gmra.mxu0 %v114
  %v160 = vpop.f32.mrf.mxu0
  %v161 = vadd.f32 %v37, %v160
  %v162 = vpop.f32.mrf.mxu0
  %v163 = vadd.f32 %v37, %v162
  %164 = vdwg.mxu0
  %v165 = vmax.f32 %v126, 0.0
  %v166 = vmax.f32 %v128, 0.0
  %v167 = vmax.f32 %v131, 0.0
  %v168 = vmax.f32 %v133, 0.0
  %v169 = vmax.f32 %v136, 0.0
  %v170 = vmax.f32 %v138, 0.0
  %v171 = vmax.f32 %v141, 0.0
  %v172 = vmax.f32 %v143, 0.0
  %v173 = vmax.f32 %v146, 0.0
  %v174 = vmax.f32 %v148, 0.0
  %v175 = vmax.f32 %v151, 0.0
  %v176 = vmax.f32 %v153, 0.0
  %v177 = vmax.f32 %v156, 0.0
  %v178 = vmax.f32 %v158, 0.0
  %v179 = vmax.f32 %v161, 0.0
  %v180 = vmax.f32 %v163, 0.0
  %vm181 = vcmask 130048
  %182 = vst.msk [vmem:[%s3] sm:$0xff] %vm181, %v165
  %183 = vst.msk [vmem:[%s3 + $0x8] sm:$0xff] %vm181, %v166
  %184 = vst.msk [vmem:[%s3 + $0x10] sm:$0xff] %vm181, %v167
  %185 = vst.msk [vmem:[%s3 + $0x18] sm:$0xff] %vm181, %v168
  %186 = vst.msk [vmem:[%s3 + $0x20] sm:$0xff] %vm181, %v169
  %187 = vst.msk [vmem:[%s3 + $0x28] sm:$0xff] %vm181, %v170
  %188 = vst.msk [vmem:[%s3 + $0x30] sm:$0xff] %vm181, %v171
  %189 = vst.msk [vmem:[%s3 + $0x38] sm:$0xff] %vm181, %v172
  %190 = vst.msk [vmem:[%s3 + $0x40] sm:$0xff] %vm181, %v173
  %191 = vst.msk [vmem:[%s3 + $0x48] sm:$0xff] %vm181, %v174
  %192 = vst.msk [vmem:[%s3 + $0x50] sm:$0xff] %vm181, %v175
  %193 = vst.msk [vmem:[%s3 + $0x58] sm:$0xff] %vm181, %v176
  %194 = vst.msk [vmem:[%s3 + $0x60] sm:$0xff] %vm181, %v177
  %195 = vst.msk [vmem:[%s3 + $0x68] sm:$0xff] %vm181, %v178
  %196 = vst.msk [vmem:[%s3 + $0x70] sm:$0xff] %vm181, %v179
  %197 = vst.msk [vmem:[%s3 + $0x78] sm:$0xff] %vm181, %v180
  // Predicated region
  $region14: #{crnn_forward.3} parent=0 // pred_check
    _
  $region15: #{crnn_forward.3} parent=0 // pred_check_branch
    %199 = sbr.rel (0) target = $region17
  $region16: #{crnn_forward.3} parent=0 // pred_region
    _
  $region17: #{crnn_forward.3} parent=0 // pred_fallthru
    _
  // Predicated region
  $region18: #{crnn_forward.3} parent=0 // pred_check
    _
  $region19: #{crnn_forward.3} parent=0 // pred_check_branch
    %201 = sbr.rel (0) target = $region21
  $region20: #{crnn_forward.3} parent=0 // pred_region
    _
  $region21: #{crnn_forward.3} parent=0 // pred_fallthru
    _

// kernel: crnn_forward.4
$region0: #{crnn_forward.4}
  #allocation0 [shape = 'u32[]', space=smem, size = 0x4, offset = 0x4, fixed_abs, tag = 'smem constant byte address 0x4 - core index']
  #allocation1 [shape = 'u32[72,128]{1,0:T(1,128)}', space=vmem, size = 0x9000, scoped, tag = 'internal scratch']
  %s0 = inlined_call_operand.vmem [shape: bf16[2,16,400], index: 0, kind: input, shape index: {}]
  %s1 = inlined_call_operand.vmem [shape: bf16[400,128], index: 1, kind: input, shape index: {}]
  %s2 = inlined_call_operand.vmem [shape: f32[1,128], index: 2, kind: input, shape index: {}]
  %s3 = inlined_call_operand.vmem [shape: f32[2,1,128], index: 3, kind: output, shape index: {}]
  %s4 = sld [smem:[#allocation0]]
  $region45: #{crnn_forward.4} parent=0
    _
  %s6 = ssub.s32 1, %s4
  %s7 = scalar_select 0, %s6, %s4
  loop: start=0, step=1, limit=4
  $region2: #{crnn_forward.4} parent=0 // loop_pre_header
    _
  $region3: #{crnn_forward.4} parent=0 // loop_header
    %s9 = sphi 0, %s13
    %p10 = scmp.ge.s32.totalorder %s9, 4
    %s19 = sphi 0, %s21
    %s22 = sphi 0, %s19
    %s23 = sphi 0, %s22
    %s39 = sphi 0, %s23
    %s43 = sphi 0, %s43
    %s45 = sphi 0, %s43
    %s46 = sphi 0, %s45
    %s60 = sphi 0, %s46
    %s64 = sphi 0, %s64
    %s66 = sphi 0, %s64
    %s67 = sphi 0, %s66
    %s81 = sphi 0, %s67
    %s87 = sphi 0, %s89
    %s90 = sphi 0, %s87
    %s91 = sphi 0, %s90
    %s107 = sphi 0, %s91
  $region4: #{crnn_forward.4} parent=0 // loop_header_branch
    %12 = sbr.rel (%p10) target = $region8
  $region5: #{crnn_forward.4} parent=0 // loop_body
    %s14 = ssub.s32 %s9, 1
    %s15 = ssub.s32 %s9, 2
    %s16 = sadd.s32 %s9, 1
    %s17 = ssub.s32 %s9, %s16
    %p18 = scmp.eq.s32.totalorder %s17, 0
    %s20 = sadd.s32 %s19, 1
    %s21 = scalar_select %p18, %s19, %s20
    %p24 = pneg %p18
    %p25 = scmp.eq.s32.totalorder %s9, 1
    %p26 = por %p24, %p25
    %p27 = scmp.ne.s32.totalorder %s19, %s22
    %p28 = scmp.eq.s32.totalorder %s9, 0
    %p29 = por %p27, %p28
    %p30 = scmp.ne.s32.totalorder %s19, %s22
    %p31 = scmp.eq.s32.totalorder %s14, 1
    %p32 = por %p30, %p31
    %p33 = scmp.ne.s32.totalorder %s22, %s23
    %p34 = scmp.eq.s32.totalorder %s14, 0
    %p35 = por %p33, %p34
    %p36 = scmp.ne.s32.totalorder %s22, %s23
    %p37 = scmp.eq.s32.totalorder %s15, 1
    %p38 = por %p36, %p37
    %p40 = scmp.ne.s32.totalorder %s23, %s39
    %p41 = scmp.eq.s32.totalorder %s15, 0
    %p42 = por %p40, %p41
    %s44 = sadd.s32 %s43, 1
    %p47 = scmp.eq.s32.totalorder %s9, 1
    %p48 = scmp.ne.s32.totalorder %s43, %s45
    %p49 = scmp.eq.s32.totalorder %s9, 0
    %p50 = por %p48, %p49
    %p51 = scmp.ne.s32.totalorder %s43, %s45
    %p52 = scmp.eq.s32.totalorder %s14, 1
    %p53 = por %p51, %p52
    %p54 = scmp.ne.s32.totalorder %s45, %s46
    %p55 = scmp.eq.s32.totalorder %s14, 0
    %p56 = por %p54, %p55
    %p57 = scmp.ne.s32.totalorder %s45, %s46
    %p58 = scmp.eq.s32.totalorder %s15, 1
    %p59 = por %p57, %p58
    %p61 = scmp.ne.s32.totalorder %s46, %s60
    %p62 = scmp.eq.s32.totalorder %s15, 0
    %p63 = por %p61, %p62
    %s65 = sadd.s32 %s64, 1
    %p68 = scmp.eq.s32.totalorder %s9, 1
    %p69 = scmp.ne.s32.totalorder %s64, %s66
    %p70 = scmp.eq.s32.totalorder %s9, 0
    %p71 = por %p69, %p70
    %p72 = scmp.ne.s32.totalorder %s64, %s66
    %p73 = scmp.eq.s32.totalorder %s14, 1
    %p74 = por %p72, %p73
    %p75 = scmp.ne.s32.totalorder %s66, %s67
    %p76 = scmp.eq.s32.totalorder %s14, 0
    %p77 = por %p75, %p76
    %p78 = scmp.ne.s32.totalorder %s66, %s67
    %p79 = scmp.eq.s32.totalorder %s15, 1
    %p80 = por %p78, %p79
    %p82 = scmp.ne.s32.totalorder %s67, %s81
    %p83 = scmp.eq.s32.totalorder %s15, 0
    %p84 = por %p82, %p83
    %s85 = ssub.s32 %s9, %s16
    %p86 = scmp.eq.s32.totalorder %s85, 0
    %s88 = sadd.s32 %s87, 1
    %s89 = scalar_select %p86, %s87, %s88
    %p92 = pneg %p86
    %p93 = scmp.eq.s32.totalorder %s9, 1
    %p94 = por %p92, %p93
    %p95 = scmp.ne.s32.totalorder %s87, %s90
    %p96 = scmp.eq.s32.totalorder %s9, 0
    %p97 = por %p95, %p96
    %p98 = scmp.ne.s32.totalorder %s87, %s90
    %p99 = scmp.eq.s32.totalorder %s14, 1
    %p100 = por %p98, %p99
    %p101 = scmp.ne.s32.totalorder %s90, %s91
    %p102 = scmp.eq.s32.totalorder %s14, 0
    %p103 = por %p101, %p102
    %p104 = scmp.ne.s32.totalorder %s90, %s91
    %p105 = scmp.eq.s32.totalorder %s15, 1
    %p106 = por %p104, %p105
    %p108 = scmp.ne.s32.totalorder %s91, %s107
    %p109 = scmp.eq.s32.totalorder %s15, 0
    %p110 = por %p108, %p109
    %p111 = scmp.le.s32.totalorder 1, %s9
    %p112 = scmp.lt.s32.totalorder %s9, 3
    %p113 = pnand %p111, %p112
    %p114 = pneg %p113
    // Predicated region
    $region9: #{crnn_forward.4} parent=5 // pred_check
      _
    $region10: #{crnn_forward.4} parent=5 // pred_check_branch
      %116 = sbr.rel (%p113) target = $region12
    $region11: #{crnn_forward.4} parent=5 // pred_region
      %s117 = ssub.s32 %s9, 1
      // Predicated region
      $region13: #{crnn_forward.4} parent=11 // pred_check
        %p118 = pneg %p56
      $region14: #{crnn_forward.4} parent=11 // pred_check_branch
        %120 = sbr.rel (%p118) target = $region16
      $region15: #{crnn_forward.4} parent=11 // pred_region
        _
      $region16: #{crnn_forward.4} parent=11 // pred_fallthru
        _
      // Predicated region
      $region17: #{crnn_forward.4} parent=11 // pred_check
        %p121 = pneg %p77
      $region18: #{crnn_forward.4} parent=11 // pred_check_branch
        %123 = sbr.rel (%p121) target = $region20
      $region19: #{crnn_forward.4} parent=11 // pred_region
        _
      $region20: #{crnn_forward.4} parent=11 // pred_fallthru
        _
    $region12: #{crnn_forward.4} parent=5 // pred_fallthru
      _
    %p124 = scmp.lt.s32.totalorder %s9, 2
    // Predicated region
    $region21: #{crnn_forward.4} parent=5 // pred_check
      %p125 = pneg %p124
    $region22: #{crnn_forward.4} parent=5 // pred_check_branch
      %127 = sbr.rel (%p125) target = $region24
    $region23: #{crnn_forward.4} parent=5 // pred_region
      // Predicated region
      $region25: #{crnn_forward.4} parent=23 // pred_check
        %p128 = pneg %p29
      $region26: #{crnn_forward.4} parent=23 // pred_check_branch
        %130 = sbr.rel (%p128) target = $region28
      $region27: #{crnn_forward.4} parent=23 // pred_region
        %p131 = scmp.lt.s32.totalorder %s9, 1
        %s132 = scalar_select %p131, %s9, 1
        %s133 = smul.addr %s132, 8
        %s134 = smul.addr %s133, 4
        %s135 = scalar_lea.vmem %s0, %s134
      $region28: #{crnn_forward.4} parent=23 // pred_fallthru
        _
    $region24: #{crnn_forward.4} parent=5 // pred_fallthru
      _
    %p136 = scmp.le.s32.totalorder 1, %s9
    %p137 = scmp.lt.s32.totalorder %s9, 3
    %p138 = pnand %p136, %p137
    %p139 = pneg %p138
    // Predicated region
    $region29: #{crnn_forward.4} parent=5 // pred_check
      _
    $region30: #{crnn_forward.4} parent=5 // pred_check_branch
      %141 = sbr.rel (%p138) target = $region32
    $region31: #{crnn_forward.4} parent=5 // pred_region
      %s142 = ssub.s32 %s9, 1
      %p143 = scmp.lt.s32.totalorder %s14, 1
      %s144 = scalar_select %p143, %s14, 1
      %s145 = smul.addr %s144, 8
      %s146 = smul.addr %s145, 4
      %s147 = scalar_lea.vmem %s0, %s146
      %p148 = pneg %p35
      %p149 = pneg %p32
      %p150 = pneg %p56
      %p151 = pneg %p53
      %p152 = pneg %p77
      %p153 = pneg %p74
      %p154 = pneg %p103
      %p155 = pneg %p100
      %p156 = scmp.lt.s32.totalorder %s14, 1
      %s157 = scalar_select %p156, %s14, 1
      %s158 = scalar_lea.vmem %s3, %s157
      %p159 = scmp.lt.s32.totalorder %s14, 1
      %s160 = scalar_select %p159, %s14, 1
      %s161 = smul.addr %s160, 8
      %s162 = smul.addr %s161, 4
      %s163 = scalar_lea.vmem %s0, %s162
      %p164 = scmp.lt.s32.totalorder %s14, 1
      %s165 = scalar_select %p164, %s14, 1
      %s166 = scalar_lea.vmem %s3, %s165
      %v168 = vld [vmem:[%s163] sm:$0xff]
      %v169 = vld [vmem:[%s163 + $0x8] sm:$0xff]
      %v170 = vld [vmem:[%s163 + $0x10] sm:$0xff]
      %v171 = vld [vmem:[%s163 + $0x18] sm:$0xff]
      %v172 = vld [vmem:[%s1] sm:$0xf]
      %v173 = vld [vmem:[%s1 + $0x4] sm:$0xf]
      %v174 = vld [vmem:[%s1 + $0x8] sm:$0xf]
      %v175 = vld [vmem:[%s1 + $0xc] sm:$0xf]
      %v176 = vld [vmem:[%s1 + $0x10] sm:$0xf]
      %v177 = vld [vmem:[%s1 + $0x14] sm:$0xf]
      %v178 = vld [vmem:[%s1 + $0x18] sm:$0xf]
      %v179 = vld [vmem:[%s1 + $0x1c] sm:$0xf]
      %v180 = vld [vmem:[%s1 + $0x20] sm:$0xf]
      %v181 = vld [vmem:[%s1 + $0x24] sm:$0xf]
      %v182 = vld [vmem:[%s1 + $0x28] sm:$0xf]
      %v183 = vld [vmem:[%s1 + $0x2c] sm:$0xf]
      %v184 = vld [vmem:[%s1 + $0x30] sm:$0xf]
      %v185 = vld [vmem:[%s1 + $0x34] sm:$0xf]
      %v186 = vld [vmem:[%s1 + $0x38] sm:$0xf]
      %v187 = vld [vmem:[%s1 + $0x3c] sm:$0xf]
      %v188 = vld [vmem:[%s1 + $0x40] sm:$0xf]
      %v189 = vld [vmem:[%s1 + $0x44] sm:$0xf]
      %v190 = vld [vmem:[%s1 + $0x48] sm:$0xf]
      %v191 = vld [vmem:[%s1 + $0x4c] sm:$0xf]
      %v192 = vld [vmem:[%s1 + $0x50] sm:$0xf]
      %v193 = vld [vmem:[%s1 + $0x54] sm:$0xf]
      %v194 = vld [vmem:[%s1 + $0x58] sm:$0xf]
      %v195 = vld [vmem:[%s1 + $0x5c] sm:$0xf]
      %v196 = vld [vmem:[%s1 + $0x60] sm:$0xf]
      %v197 = vld [vmem:[%s1 + $0x64] sm:$0xf]
      %v198 = vld [vmem:[%s1 + $0x68] sm:$0xf]
      %v199 = vld [vmem:[%s1 + $0x6c] sm:$0xf]
      %v200 = vld [vmem:[%s1 + $0x70] sm:$0xf]
      %v201 = vld [vmem:[%s1 + $0x74] sm:$0xf]
      %v202 = vld [vmem:[%s1 + $0x78] sm:$0xf]
      %v203 = vld [vmem:[%s1 + $0x7c] sm:$0xf]
      %v204 = vld [vmem:[%s1 + $0x80] sm:$0xf]
      %v205 = vld [vmem:[%s1 + $0x84] sm:$0xf]
      %v206 = vld [vmem:[%s1 + $0x88] sm:$0xf]
      %v207 = vld [vmem:[%s1 + $0x8c] sm:$0xf]
      %v208 = vld [vmem:[%s1 + $0x90] sm:$0xf]
      %v209 = vld [vmem:[%s1 + $0x94] sm:$0xf]
      %v210 = vld [vmem:[%s1 + $0x98] sm:$0xf]
      %v211 = vld [vmem:[%s1 + $0x9c] sm:$0xf]
      %v212 = vld [vmem:[%s1 + $0xa0] sm:$0xf]
      %v213 = vld [vmem:[%s1 + $0xa4] sm:$0xf]
      %v214 = vld [vmem:[%s1 + $0xa8] sm:$0xf]
      %v215 = vld [vmem:[%s1 + $0xac] sm:$0xf]
      %v216 = vld [vmem:[%s1 + $0xb0] sm:$0xf]
      %v217 = vld [vmem:[%s1 + $0xb4] sm:$0xf]
      %v218 = vld [vmem:[%s1 + $0xb8] sm:$0xf]
      %v219 = vld [vmem:[%s1 + $0xbc] sm:$0xf]
      %v220 = vld [vmem:[%s1 + $0xc0] sm:$0xf]
      %v221 = vld [vmem:[%s1 + $0xc4] sm:$0xf]
      %v222 = vld [vmem:[%s2] sm:$0x1]
      %v224 = vperm.slane %v222, 0
      %v230 = vunpack.c.l.b16 %v168
      %v231 = vunpack.c.h.b16 %v168
      %v232 = vunpack.c.l.b16 %v169
      %v233 = vunpack.c.h.b16 %v169
      %v234 = vunpack.c.l.b16 %v170
      %v235 = vunpack.c.h.b16 %v170
      %v236 = vunpack.c.l.b16 %v171
      %v237 = vunpack.c.h.b16 %v171
      %v238 = vpack.c.b16 %v234, %v230
      %v239 = vpack.c.b16 %v235, %v231
      %v240 = vpack.c.b16 %v236, %v232
      %v241 = vpack.c.b16 %v237, %v233
      %v295 = vunpack.c.l.b16 %v172
      %v296 = vunpack.c.l.b16 %v173
      %v297 = vunpack.c.l.b16 %v174
      %v298 = vunpack.c.l.b16 %v175
      %v299 = vunpack.c.l.b16 %v176
      %v300 = vunpack.c.l.b16 %v177
      %v301 = vunpack.c.l.b16 %v178
      %v302 = vunpack.c.l.b16 %v179
      %v303 = vunpack.c.l.b16 %v180
      %v304 = vunpack.c.l.b16 %v181
      %v305 = vunpack.c.l.b16 %v182
      %v306 = vunpack.c.l.b16 %v183
      %v307 = vunpack.c.l.b16 %v184
      %v308 = vunpack.c.l.b16 %v185
      %v309 = vunpack.c.l.b16 %v186
      %v310 = vunpack.c.l.b16 %v187
      %v311 = vunpack.c.l.b16 %v188
      %v312 = vunpack.c.l.b16 %v189
      %v313 = vunpack.c.l.b16 %v190
      %v314 = vunpack.c.l.b16 %v191
      %v315 = vunpack.c.l.b16 %v192
      %v316 = vunpack.c.l.b16 %v193
      %v317 = vunpack.c.l.b16 %v194
      %v318 = vunpack.c.l.b16 %v195
      %v319 = vunpack.c.l.b16 %v196
      %v320 = vunpack.c.l.b16 %v197
      %v321 = vunpack.c.l.b16 %v198
      %v322 = vunpack.c.l.b16 %v199
      %v323 = vunpack.c.l.b16 %v200
      %v324 = vunpack.c.l.b16 %v201
      %v325 = vunpack.c.l.b16 %v202
      %v326 = vunpack.c.l.b16 %v203
      %v327 = vunpack.c.l.b16 %v204
      %v328 = vunpack.c.l.b16 %v205
      %v329 = vunpack.c.l.b16 %v206
      %v330 = vunpack.c.l.b16 %v207
      %v331 = vunpack.c.l.b16 %v208
      %v332 = vunpack.c.l.b16 %v209
      %v333 = vunpack.c.l.b16 %v210
      %v334 = vunpack.c.l.b16 %v211
      %v335 = vunpack.c.l.b16 %v212
      %v336 = vunpack.c.l.b16 %v213
      %v337 = vunpack.c.l.b16 %v214
      %v338 = vunpack.c.l.b16 %v215
      %v339 = vunpack.c.l.b16 %v216
      %v340 = vunpack.c.l.b16 %v217
      %v341 = vunpack.c.l.b16 %v218
      %v342 = vunpack.c.l.b16 %v219
      %v343 = vunpack.c.l.b16 %v220
      %v344 = vunpack.c.l.b16 %v221
      %v345 = vpack.c.b16 %v296, %v295
      %v346 = vpack.c.b16 %v298, %v297
      %v347 = vpack.c.b16 %v300, %v299
      %v348 = vpack.c.b16 %v302, %v301
      %v349 = vpack.c.b16 %v304, %v303
      %v350 = vpack.c.b16 %v306, %v305
      %v351 = vpack.c.b16 %v308, %v307
      %v352 = vpack.c.b16 %v310, %v309
      %v353 = vpack.c.b16 %v312, %v311
      %v354 = vpack.c.b16 %v314, %v313
      %v355 = vpack.c.b16 %v316, %v315
      %v356 = vpack.c.b16 %v318, %v317
      %v357 = vpack.c.b16 %v320, %v319
      %v358 = vpack.c.b16 %v322, %v321
      %v359 = vpack.c.b16 %v324, %v323
      %v360 = vpack.c.b16 %v326, %v325
      %v361 = vpack.c.b16 %v328, %v327
      %v362 = vpack.c.b16 %v330, %v329
      %v363 = vpack.c.b16 %v332, %v331
      %v364 = vpack.c.b16 %v334, %v333
      %v365 = vpack.c.b16 %v336, %v335
      %v366 = vpack.c.b16 %v338, %v337
      %v367 = vpack.c.b16 %v340, %v339
      %v368 = vpack.c.b16 %v342, %v341
      %v369 = vpack.c.b16 %v344, %v343
      %vm395 = vcmask 130048
      %v397 = vsel %vm395, %v241, 0
      %399 = vmatpush.bf16.msra.mxu0 %v352
      %400 = vmatpush.bf16.msra.mxu0 %v351
      %401 = vmatpush.bf16.msra.mxu0 %v350
      %402 = vmatpush.bf16.msra.mxu0 %v349
      %403 = vmatpush.bf16.msra.mxu0 %v348
      %404 = vmatpush.bf16.msra.mxu0 %v347
      %405 = vmatpush.bf16.msra.mxu0 %v346
      %406 = vmatpush.bf16.msra.mxu0 %v345
      %407 = vmatmul.bf16.gmra.mxu0 %v238
      %v408 = vpop.f32.mrf.mxu0
      %v409 = vadd.f32 %v224, %v408
      %v410 = vpop.f32.mrf.mxu0
      %v411 = vadd.f32 %v224, %v410
      %412 = vdwg.mxu0
      %413 = vmatpush.bf16.msra.mxu0 %v360
      %414 = vmatpush.bf16.msra.mxu0 %v359
      %415 = vmatpush.bf16.msra.mxu0 %v358
      %416 = vmatpush.bf16.msra.mxu0 %v357
      %417 = vmatpush.bf16.msra.mxu0 %v356
      %418 = vmatpush.bf16.msra.mxu0 %v355
      %419 = vmatpush.bf16.msra.mxu0 %v354
      %420 = vmatpush.bf16.msra.mxu0 %v353
      %421 = vmatmul.bf16.gmra.mxu0 %v239
      %v422 = vpop.f32.mrf.mxu0
      %v423 = vadd.f32 %v409, %v422
      %v424 = vpop.f32.mrf.mxu0
      %v425 = vadd.f32 %v411, %v424
      %426 = vdwg.mxu0
      %427 = vmatpush.bf16.msra.mxu0 %v368
      %428 = vmatpush.bf16.msra.mxu0 %v367
      %429 = vmatpush.bf16.msra.mxu0 %v366
      %430 = vmatpush.bf16.msra.mxu0 %v365
      %431 = vmatpush.bf16.msra.mxu0 %v364
      %432 = vmatpush.bf16.msra.mxu0 %v363
      %433 = vmatpush.bf16.msra.mxu0 %v362
      %434 = vmatpush.bf16.msra.mxu0 %v361
      %435 = vmatmul.bf16.gmra.mxu0 %v240
      %v436 = vpop.f32.mrf.mxu0
      %v437 = vadd.f32 %v423, %v436
      %v438 = vpop.f32.mrf.mxu0
      %v439 = vadd.f32 %v425, %v438
      %440 = vdwg.mxu0
      %441 = vmatpush.bf16.msra.mxu0 0
      %442 = vmatpush.bf16.msra.mxu0 0
      %443 = vmatpush.bf16.msra.mxu0 0
      %444 = vmatpush.bf16.msra.mxu0 0
      %445 = vmatpush.bf16.msra.mxu0 0
      %446 = vmatpush.bf16.msra.mxu0 0
      %447 = vmatpush.bf16.msra.mxu0 0
      %448 = vmatpush.bf16.msra.mxu0 %v369
      %449 = vmatmul.bf16.gmra.mxu0 %v397
      %v450 = vpop.f32.mrf.mxu0
      %v451 = vadd.f32 %v437, %v450
      %v452 = vpop.f32.mrf.mxu0
      %v453 = vadd.f32 %v439, %v452
      %454 = vdwg.mxu0
      %v455 = vmax.f32 %v451, 0.0
      %v456 = vmax.f32 %v453, 0.0
      %v457 = vadd.f32 %v455, %v456
      %v458 = vrot.slane %v457, 4
      %v459 = vadd.f32 %v457, %v458
      %v460 = vrot.slane %v459, 2
      %v461 = vadd.f32 %v459, %v460
      %v462 = vrot.slane %v461, 1
      %v463 = vadd.f32 %v461, %v462
      %v464 = vrcp.pop 16.0
      %v465 = vmul.f32 16.0, %v464
      %v466 = vsub.f32 1.0, %v465
      %v467 = vmul.f32 %v464, %v466
      %v468 = vadd.f32 %v464, %v467
      %vm469 = vweird.f32 %v464
      %v470 = vsel %vm469, %v464, %v468
      %v471 = vmul.f32 %v463, %v470
      %472 = vst [vmem:[%s166] sm:$0x1] %v471
      %p473 = scmp.lt.s32.totalorder %s14, 1
      %s474 = scalar_select %p473, %s14, 1
      %s475 = scalar_lea.vmem %s3, %s474
      // Predicated region
      $region33: #{crnn_forward.4} parent=31 // pred_check
        %p476 = pneg %p100
      $region34: #{crnn_forward.4} parent=31 // pred_check_branch
        %478 = sbr.rel (%p476) target = $region36
      $region35: #{crnn_forward.4} parent=31 // pred_region
        _
      $region36: #{crnn_forward.4} parent=31 // pred_fallthru
        _
    $region32: #{crnn_forward.4} parent=5 // pred_fallthru
      _
    %p479 = scmp.le.s32.totalorder 2, %s9
    // Predicated region
    $region37: #{crnn_forward.4} parent=5 // pred_check
      %p480 = pneg %p479
    $region38: #{crnn_forward.4} parent=5 // pred_check_branch
      %482 = sbr.rel (%p480) target = $region40
    $region39: #{crnn_forward.4} parent=5 // pred_region
      %s483 = ssub.s32 %s9, 2
      // Predicated region
      $region41: #{crnn_forward.4} parent=39 // pred_check
        %p484 = pneg %p106
      $region42: #{crnn_forward.4} parent=39 // pred_check_branch
        %486 = sbr.rel (%p484) target = $region44
      $region43: #{crnn_forward.4} parent=39 // pred_region
        %p487 = scmp.lt.s32.totalorder %s15, 1
        %s488 = scalar_select %p487, %s15, 1
        %s489 = scalar_lea.vmem %s3, %s488
      $region44: #{crnn_forward.4} parent=39 // pred_fallthru
        _
    $region40: #{crnn_forward.4} parent=5 // pred_fallthru
      _
  $region6: #{crnn_forward.4} parent=0 // loop_footer
    %s13 = sadd.s32 1, %s9
  $region7: #{crnn_forward.4} parent=0 // loop_footer_branch
    %8 = sbr.rel target = $region3
  $region8: #{crnn_forward.4} parent=0 // loop_exit
    _

// kernel: crnn_forward.5
$region0: #{crnn_forward.5}
  #allocation0 [shape = 'u32[]', space=smem, size = 0x4, offset = 0x4, fixed_abs, tag = 'smem constant byte address 0x4 - core index']
  #allocation1 [shape = 'u32[72,128]{1,0:T(1,128)}', space=vmem, size = 0x9000, scoped, tag = 'internal scratch']
  #allocation2 [shape = 'f32[2,512]{1,0:T(2,128)}', space=vmem, size = 0x1000, scoped, tag = 'scratch operand']
  #allocation3 [shape = 'f32[2,128]{1,0:T(2,128)}', space=vmem, size = 0x400, scoped, tag = 'scratch operand']
  #allocation4 [shape = 'f32[1,128]{1,0:T(1,128)}', space=vmem, size = 0x200, scoped, tag = 'scratch operand']
  #allocation5 [shape = 'f32[1,128]{1,0:T(1,128)}', space=vmem, size = 0x200, scoped, tag = 'scratch operand']
  %s0 = inlined_call_operand.vmem [shape: f32[2,128], index: 0, kind: input, shape index: {}]
  %s1 = inlined_call_operand.vmem [shape: f32[128,512], index: 1, kind: input, shape index: {}]
  %s2 = inlined_call_operand.vmem [shape: f32[128,512], index: 2, kind: input, shape index: {}]
  %s3 = inlined_call_operand.vmem [shape: f32[1,512], index: 3, kind: input, shape index: {}]
  %s4 = inlined_call_operand.vmem [shape: f32[128,128], index: 4, kind: input, shape index: {}]
  %s5 = inlined_call_operand.vmem [shape: f32[1,128], index: 5, kind: input, shape index: {}]
  %s6 = inlined_call_operand.hbm [shape: f32[2,128], index: 6, kind: output, shape index: {}]
  %s7 = sld [smem:[#allocation0]]
  $region34: #{crnn_forward.5} parent=0
    _
  %s9 = ssub.s32 1, %s7
  %s10 = scalar_select 0, %s9, %s7
  $region1: #{crnn_forward.5} parent=0
    #allocation6 [shape = 'u8[1024]{0}', space=vmem, size = 0x400, scoped, tag = 'output window, operand 0, single buffered']
    #allocation7 [shape = 's32[1]{0}', space=sflag, size = 0x4, scoped, tag = 'scoped memory for crnn_forward.5']
    %11 = vsyncpa [#allocation7], 0
    // Predicated region
    $region2: #{crnn_forward.5} parent=1 // pred_check
      _
    $region3: #{crnn_forward.5} parent=1 // pred_check_branch
      %13 = sbr.rel (0) target = $region5
    $region4: #{crnn_forward.5} parent=1 // pred_region
      _
    $region5: #{crnn_forward.5} parent=1 // pred_fallthru
      _
    // Predicated region
    $region6: #{crnn_forward.5} parent=1 // pred_check
      _
    $region7: #{crnn_forward.5} parent=1 // pred_check_branch
      %15 = sbr.rel (0) target = $region9
    $region8: #{crnn_forward.5} parent=1 // pred_region
      _
    $region9: #{crnn_forward.5} parent=1 // pred_fallthru
      _
    // Predicated region
    $region10: #{crnn_forward.5} parent=1 // pred_check
      _
    $region11: #{crnn_forward.5} parent=1 // pred_check_branch
      %17 = sbr.rel (0) target = $region13
    $region12: #{crnn_forward.5} parent=1 // pred_region
      _
    $region13: #{crnn_forward.5} parent=1 // pred_fallthru
      _
    // Predicated region
    $region14: #{crnn_forward.5} parent=1 // pred_check
      _
    $region15: #{crnn_forward.5} parent=1 // pred_check_branch
      %19 = sbr.rel (0) target = $region17
    $region16: #{crnn_forward.5} parent=1 // pred_region
      _
    $region17: #{crnn_forward.5} parent=1 // pred_fallthru
      _
    // Predicated region
    $region18: #{crnn_forward.5} parent=1 // pred_check
      _
    $region19: #{crnn_forward.5} parent=1 // pred_check_branch
      %21 = sbr.rel (0) target = $region21
    $region20: #{crnn_forward.5} parent=1 // pred_region
      _
    $region21: #{crnn_forward.5} parent=1 // pred_fallthru
      _
    // Predicated region
    $region22: #{crnn_forward.5} parent=1 // pred_check
      _
    $region23: #{crnn_forward.5} parent=1 // pred_check_branch
      %23 = sbr.rel (0) target = $region25
    $region24: #{crnn_forward.5} parent=1 // pred_region
      _
    $region25: #{crnn_forward.5} parent=1 // pred_fallthru
      _
    %v24 = vld [vmem:[%s0] sm:$0x3]
    %v25 = vld [vmem:[%s1] sm:$0xff]
    %v26 = vld [vmem:[%s1 + $0x8] sm:$0xff]
    %v27 = vld [vmem:[%s1 + $0x10] sm:$0xff]
    %v28 = vld [vmem:[%s1 + $0x18] sm:$0xff]
    %v29 = vld [vmem:[%s1 + $0x20] sm:$0xff]
    %v30 = vld [vmem:[%s1 + $0x28] sm:$0xff]
    %v31 = vld [vmem:[%s1 + $0x30] sm:$0xff]
    %v32 = vld [vmem:[%s1 + $0x38] sm:$0xff]
    %v33 = vld [vmem:[%s1 + $0x40] sm:$0xff]
    %v34 = vld [vmem:[%s1 + $0x48] sm:$0xff]
    %v35 = vld [vmem:[%s1 + $0x50] sm:$0xff]
    %v36 = vld [vmem:[%s1 + $0x58] sm:$0xff]
    %v37 = vld [vmem:[%s1 + $0x60] sm:$0xff]
    %v38 = vld [vmem:[%s1 + $0x68] sm:$0xff]
    %v39 = vld [vmem:[%s1 + $0x70] sm:$0xff]
    %v40 = vld [vmem:[%s1 + $0x78] sm:$0xff]
    %v41 = vld [vmem:[%s1 + $0x80] sm:$0xff]
    %v42 = vld [vmem:[%s1 + $0x88] sm:$0xff]
    %v43 = vld [vmem:[%s1 + $0x90] sm:$0xff]
    %v44 = vld [vmem:[%s1 + $0x98] sm:$0xff]
    %v45 = vld [vmem:[%s1 + $0xa0] sm:$0xff]
    %v46 = vld [vmem:[%s1 + $0xa8] sm:$0xff]
    %v47 = vld [vmem:[%s1 + $0xb0] sm:$0xff]
    %v48 = vld [vmem:[%s1 + $0xb8] sm:$0xff]
    %v49 = vld [vmem:[%s1 + $0xc0] sm:$0xff]
    %v50 = vld [vmem:[%s1 + $0xc8] sm:$0xff]
    %v51 = vld [vmem:[%s1 + $0xd0] sm:$0xff]
    %v52 = vld [vmem:[%s1 + $0xd8] sm:$0xff]
    %v53 = vld [vmem:[%s1 + $0xe0] sm:$0xff]
    %v54 = vld [vmem:[%s1 + $0xe8] sm:$0xff]
    %v55 = vld [vmem:[%s1 + $0xf0] sm:$0xff]
    %v56 = vld [vmem:[%s1 + $0xf8] sm:$0xff]
    %v57 = vld [vmem:[%s1 + $0x100] sm:$0xff]
    %v58 = vld [vmem:[%s1 + $0x108] sm:$0xff]
    %v59 = vld [vmem:[%s1 + $0x110] sm:$0xff]
    %v60 = vld [vmem:[%s1 + $0x118] sm:$0xff]
    %v61 = vld [vmem:[%s1 + $0x120] sm:$0xff]
    %v62 = vld [vmem:[%s1 + $0x128] sm:$0xff]
    %v63 = vld [vmem:[%s1 + $0x130] sm:$0xff]
    %v64 = vld [vmem:[%s1 + $0x138] sm:$0xff]
    %v65 = vld [vmem:[%s1 + $0x140] sm:$0xff]
    %v66 = vld [vmem:[%s1 + $0x148] sm:$0xff]
    %v67 = vld [vmem:[%s1 + $0x150] sm:$0xff]
    %v68 = vld [vmem:[%s1 + $0x158] sm:$0xff]
    %v69 = vld [vmem:[%s1 + $0x160] sm:$0xff]
    %v70 = vld [vmem:[%s1 + $0x168] sm:$0xff]
    %v71 = vld [vmem:[%s1 + $0x170] sm:$0xff]
    %v72 = vld [vmem:[%s1 + $0x178] sm:$0xff]
    %v73 = vld [vmem:[%s1 + $0x180] sm:$0xff]
    %v74 = vld [vmem:[%s1 + $0x188] sm:$0xff]
    %v75 = vld [vmem:[%s1 + $0x190] sm:$0xff]
    %v76 = vld [vmem:[%s1 + $0x198] sm:$0xff]
    %v77 = vld [vmem:[%s1 + $0x1a0] sm:$0xff]
    %v78 = vld [vmem:[%s1 + $0x1a8] sm:$0xff]
    %v79 = vld [vmem:[%s1 + $0x1b0] sm:$0xff]
    %v80 = vld [vmem:[%s1 + $0x1b8] sm:$0xff]
    %v81 = vld [vmem:[%s1 + $0x1c0] sm:$0xff]
    %v82 = vld [vmem:[%s1 + $0x1c8] sm:$0xff]
    %v83 = vld [vmem:[%s1 + $0x1d0] sm:$0xff]
    %v84 = vld [vmem:[%s1 + $0x1d8] sm:$0xff]
    %v85 = vld [vmem:[%s1 + $0x1e0] sm:$0xff]
    %v86 = vld [vmem:[%s1 + $0x1e8] sm:$0xff]
    %v87 = vld [vmem:[%s1 + $0x1f0] sm:$0xff]
    %v88 = vld [vmem:[%s1 + $0x1f8] sm:$0xff]
    %v89 = vld [vmem:[%s3] sm:$0xf]
    %v91 = vperm.slane %v89, 0
    %v92 = vperm.slane %v89, 1
    %v93 = vperm.slane %v89, 2
    %v94 = vperm.slane %v89, 3
    %99 = vmatpush.msra.mxu0 %v85
    %100 = vmatpush.msra.mxu0 %v81
    %101 = vmatpush.msra.mxu0 %v77
    %102 = vmatpush.msra.mxu0 %v73
    %103 = vmatpush.msra.mxu0 %v69
    %104 = vmatpush.msra.mxu0 %v65
    %105 = vmatpush.msra.mxu0 %v61
    %106 = vmatpush.msra.mxu0 %v57
    %107 = vmatpush.msra.mxu0 %v53
    %108 = vmatpush.msra.mxu0 %v49
    %109 = vmatpush.msra.mxu0 %v45
    %110 = vmatpush.msra.mxu0 %v41
    %111 = vmatpush.msra.mxu0 %v37
    %112 = vmatpush.msra.mxu0 %v33
    %113 = vmatpush.msra.mxu0 %v29
    %114 = vmatpush.msra.mxu0 %v25
    %115 = vmatmul.f32.gmra.mxu0 %v24
    %v116 = vpop.f32.mrf.mxu0
    %v117 = vadd.f32 %v91, %v116
    %118 = vdwg.mxu0
    %119 = vmatpush.msra.mxu0 %v86
    %120 = vmatpush.msra.mxu0 %v82
    %121 = vmatpush.msra.mxu0 %v78
    %122 = vmatpush.msra.mxu0 %v74
    %123 = vmatpush.msra.mxu0 %v70
    %124 = vmatpush.msra.mxu0 %v66
    %125 = vmatpush.msra.mxu0 %v62
    %126 = vmatpush.msra.mxu0 %v58
    %127 = vmatpush.msra.mxu0 %v54
    %128 = vmatpush.msra.mxu0 %v50
    %129 = vmatpush.msra.mxu0 %v46
    %130 = vmatpush.msra.mxu0 %v42
    %131 = vmatpush.msra.mxu0 %v38
    %132 = vmatpush.msra.mxu0 %v34
    %133 = vmatpush.msra.mxu0 %v30
    %134 = vmatpush.msra.mxu0 %v26
    %135 = vmatmul.f32.gmra.mxu0 %v24
    %v136 = vpop.f32.mrf.mxu0
    %v137 = vadd.f32 %v92, %v136
    %138 = vdwg.mxu0
    %139 = vmatpush.msra.mxu0 %v87
    %140 = vmatpush.msra.mxu0 %v83
    %141 = vmatpush.msra.mxu0 %v79
    %142 = vmatpush.msra.mxu0 %v75
    %143 = vmatpush.msra.mxu0 %v71
    %144 = vmatpush.msra.mxu0 %v67
    %145 = vmatpush.msra.mxu0 %v63
    %146 = vmatpush.msra.mxu0 %v59
    %147 = vmatpush.msra.mxu0 %v55
    %148 = vmatpush.msra.mxu0 %v51
    %149 = vmatpush.msra.mxu0 %v47
    %150 = vmatpush.msra.mxu0 %v43
    %151 = vmatpush.msra.mxu0 %v39
    %152 = vmatpush.msra.mxu0 %v35
    %153 = vmatpush.msra.mxu0 %v31
    %154 = vmatpush.msra.mxu0 %v27
    %155 = vmatmul.f32.gmra.mxu0 %v24
    %v156 = vpop.f32.mrf.mxu0
    %v157 = vadd.f32 %v93, %v156
    %158 = vdwg.mxu0
    %159 = vmatpush.msra.mxu0 %v88
    %160 = vmatpush.msra.mxu0 %v84
    %161 = vmatpush.msra.mxu0 %v80
    %162 = vmatpush.msra.mxu0 %v76
    %163 = vmatpush.msra.mxu0 %v72
    %164 = vmatpush.msra.mxu0 %v68
    %165 = vmatpush.msra.mxu0 %v64
    %166 = vmatpush.msra.mxu0 %v60
    %167 = vmatpush.msra.mxu0 %v56
    %168 = vmatpush.msra.mxu0 %v52
    %169 = vmatpush.msra.mxu0 %v48
    %170 = vmatpush.msra.mxu0 %v44
    %171 = vmatpush.msra.mxu0 %v40
    %172 = vmatpush.msra.mxu0 %v36
    %173 = vmatpush.msra.mxu0 %v32
    %174 = vmatpush.msra.mxu0 %v28
    %175 = vmatmul.f32.gmra.mxu0 %v24
    %v176 = vpop.f32.mrf.mxu0
    %v177 = vadd.f32 %v94, %v176
    %178 = vdwg.mxu0
    %v183 = vrot.slane %v137, 6
    %v184 = vrot.slane %v157, 4
    %v185 = vrot.slane %v177, 2
    %vm186 = vcmask 1041408
    %v187 = vsel %vm186, %v117, %v183
    %vm188 = vcmask 1045508
    %v189 = vsel %vm188, %v184, %v185
    %vm190 = vcmask 1043456
    %v191 = vsel %vm190, %v187, %v189
    %193 = vst [vmem:[#allocation2] sm:$0xff] %v191
    %194 = vst [vmem:[#allocation4] sm:$0x1] 0.0
    %195 = vst [vmem:[#allocation5] sm:$0x1] 0.0
    %v196 = vld [vmem:[#allocation2] ss:$2 sm:$0xf]
    %v197 = vld [vmem:[#allocation4] sm:$0x1]
    %v198 = vld [vmem:[%s2] sm:$0xff]
    %v199 = vld [vmem:[%s2 + $0x8] sm:$0xff]
    %v200 = vld [vmem:[%s2 + $0x10] sm:$0xff]
    %v201 = vld [vmem:[%s2 + $0x18] sm:$0xff]
    %v202 = vld [vmem:[%s2 + $0x20] sm:$0xff]
    %v203 = vld [vmem:[%s2 + $0x28] sm:$0xff]
    %v204 = vld [vmem:[%s2 + $0x30] sm:$0xff]
    %v205 = vld [vmem:[%s2 + $0x38] sm:$0xff]
    %v206 = vld [vmem:[%s2 + $0x40] sm:$0xff]
    %v207 = vld [vmem:[%s2 + $0x48] sm:$0xff]
    %v208 = vld [vmem:[%s2 + $0x50] sm:$0xff]
    %v209 = vld [vmem:[%s2 + $0x58] sm:$0xff]
    %v210 = vld [vmem:[%s2 + $0x60] sm:$0xff]
    %v211 = vld [vmem:[%s2 + $0x68] sm:$0xff]
    %v212 = vld [vmem:[%s2 + $0x70] sm:$0xff]
    %v213 = vld [vmem:[%s2 + $0x78] sm:$0xff]
    %v214 = vld [vmem:[%s2 + $0x80] sm:$0xff]
    %v215 = vld [vmem:[%s2 + $0x88] sm:$0xff]
    %v216 = vld [vmem:[%s2 + $0x90] sm:$0xff]
    %v217 = vld [vmem:[%s2 + $0x98] sm:$0xff]
    %v218 = vld [vmem:[%s2 + $0xa0] sm:$0xff]
    %v219 = vld [vmem:[%s2 + $0xa8] sm:$0xff]
    %v220 = vld [vmem:[%s2 + $0xb0] sm:$0xff]
    %v221 = vld [vmem:[%s2 + $0xb8] sm:$0xff]
    %v222 = vld [vmem:[%s2 + $0xc0] sm:$0xff]
    %v223 = vld [vmem:[%s2 + $0xc8] sm:$0xff]
    %v224 = vld [vmem:[%s2 + $0xd0] sm:$0xff]
    %v225 = vld [vmem:[%s2 + $0xd8] sm:$0xff]
    %v226 = vld [vmem:[%s2 + $0xe0] sm:$0xff]
    %v227 = vld [vmem:[%s2 + $0xe8] sm:$0xff]
    %v228 = vld [vmem:[%s2 + $0xf0] sm:$0xff]
    %v229 = vld [vmem:[%s2 + $0xf8] sm:$0xff]
    %v230 = vld [vmem:[%s2 + $0x100] sm:$0xff]
    %v231 = vld [vmem:[%s2 + $0x108] sm:$0xff]
    %v232 = vld [vmem:[%s2 + $0x110] sm:$0xff]
    %v233 = vld [vmem:[%s2 + $0x118] sm:$0xff]
    %v234 = vld [vmem:[%s2 + $0x120] sm:$0xff]
    %v235 = vld [vmem:[%s2 + $0x128] sm:$0xff]
    %v236 = vld [vmem:[%s2 + $0x130] sm:$0xff]
    %v237 = vld [vmem:[%s2 + $0x138] sm:$0xff]
    %v238 = vld [vmem:[%s2 + $0x140] sm:$0xff]
    %v239 = vld [vmem:[%s2 + $0x148] sm:$0xff]
    %v240 = vld [vmem:[%s2 + $0x150] sm:$0xff]
    %v241 = vld [vmem:[%s2 + $0x158] sm:$0xff]
    %v242 = vld [vmem:[%s2 + $0x160] sm:$0xff]
    %v243 = vld [vmem:[%s2 + $0x168] sm:$0xff]
    %v244 = vld [vmem:[%s2 + $0x170] sm:$0xff]
    %v245 = vld [vmem:[%s2 + $0x178] sm:$0xff]
    %v246 = vld [vmem:[%s2 + $0x180] sm:$0xff]
    %v247 = vld [vmem:[%s2 + $0x188] sm:$0xff]
    %v248 = vld [vmem:[%s2 + $0x190] sm:$0xff]
    %v249 = vld [vmem:[%s2 + $0x198] sm:$0xff]
    %v250 = vld [vmem:[%s2 + $0x1a0] sm:$0xff]
    %v251 = vld [vmem:[%s2 + $0x1a8] sm:$0xff]
    %v252 = vld [vmem:[%s2 + $0x1b0] sm:$0xff]
    %v253 = vld [vmem:[%s2 + $0x1b8] sm:$0xff]
    %v254 = vld [vmem:[%s2 + $0x1c0] sm:$0xff]
    %v255 = vld [vmem:[%s2 + $0x1c8] sm:$0xff]
    %v256 = vld [vmem:[%s2 + $0x1d0] sm:$0xff]
    %v257 = vld [vmem:[%s2 + $0x1d8] sm:$0xff]
    %v258 = vld [vmem:[%s2 + $0x1e0] sm:$0xff]
    %v259 = vld [vmem:[%s2 + $0x1e8] sm:$0xff]
    %v260 = vld [vmem:[%s2 + $0x1f0] sm:$0xff]
    %v261 = vld [vmem:[%s2 + $0x1f8] sm:$0xff]
    %262 = vmatpush.msra.mxu0 %v258
    %263 = vmatpush.msra.mxu0 %v254
    %264 = vmatpush.msra.mxu0 %v250
    %265 = vmatpush.msra.mxu0 %v246
    %266 = vmatpush.msra.mxu0 %v242
    %267 = vmatpush.msra.mxu0 %v238
    %268 = vmatpush.msra.mxu0 %v234
    %269 = vmatpush.msra.mxu0 %v230
    %270 = vmatpush.msra.mxu0 %v226
    %271 = vmatpush.msra.mxu0 %v222
    %272 = vmatpush.msra.mxu0 %v218
    %273 = vmatpush.msra.mxu0 %v214
    %274 = vmatpush.msra.mxu0 %v210
    %275 = vmatpush.msra.mxu0 %v206
    %276 = vmatpush.msra.mxu0 %v202
    %277 = vmatpush.msra.mxu0 %v198
    %278 = vmatmul.f32.gmra.mxu0 %v197
    %v279 = vpop.f32.mrf.mxu0
    %v280 = vadd.f32 0.0, %v279
    %281 = vdwg.mxu0
    %282 = vmatpush.msra.mxu0 %v259
    %283 = vmatpush.msra.mxu0 %v255
    %284 = vmatpush.msra.mxu0 %v251
    %285 = vmatpush.msra.mxu0 %v247
    %286 = vmatpush.msra.mxu0 %v243
    %287 = vmatpush.msra.mxu0 %v239
    %288 = vmatpush.msra.mxu0 %v235
    %289 = vmatpush.msra.mxu0 %v231
    %290 = vmatpush.msra.mxu0 %v227
    %291 = vmatpush.msra.mxu0 %v223
    %292 = vmatpush.msra.mxu0 %v219
    %293 = vmatpush.msra.mxu0 %v215
    %294 = vmatpush.msra.mxu0 %v211
    %295 = vmatpush.msra.mxu0 %v207
    %296 = vmatpush.msra.mxu0 %v203
    %297 = vmatpush.msra.mxu0 %v199
    %298 = vmatmul.f32.gmra.mxu0 %v197
    %v299 = vpop.f32.mrf.mxu0
    %v300 = vadd.f32 0.0, %v299
    %301 = vdwg.mxu0
    %302 = vmatpush.msra.mxu0 %v260
    %303 = vmatpush.msra.mxu0 %v256
    %304 = vmatpush.msra.mxu0 %v252
    %305 = vmatpush.msra.mxu0 %v248
    %306 = vmatpush.msra.mxu0 %v244
    %307 = vmatpush.msra.mxu0 %v240
    %308 = vmatpush.msra.mxu0 %v236
    %309 = vmatpush.msra.mxu0 %v232
    %310 = vmatpush.msra.mxu0 %v228
    %311 = vmatpush.msra.mxu0 %v224
    %312 = vmatpush.msra.mxu0 %v220
    %313 = vmatpush.msra.mxu0 %v216
    %314 = vmatpush.msra.mxu0 %v212
    %315 = vmatpush.msra.mxu0 %v208
    %316 = vmatpush.msra.mxu0 %v204
    %317 = vmatpush.msra.mxu0 %v200
    %318 = vmatmul.f32.gmra.mxu0 %v197
    %v319 = vpop.f32.mrf.mxu0
    %v320 = vadd.f32 0.0, %v319
    %321 = vdwg.mxu0
    %322 = vmatpush.msra.mxu0 %v261
    %323 = vmatpush.msra.mxu0 %v257
    %324 = vmatpush.msra.mxu0 %v253
    %325 = vmatpush.msra.mxu0 %v249
    %326 = vmatpush.msra.mxu0 %v245
    %327 = vmatpush.msra.mxu0 %v241
    %328 = vmatpush.msra.mxu0 %v237
    %329 = vmatpush.msra.mxu0 %v233
    %330 = vmatpush.msra.mxu0 %v229
    %331 = vmatpush.msra.mxu0 %v225
    %332 = vmatpush.msra.mxu0 %v221
    %333 = vmatpush.msra.mxu0 %v217
    %334 = vmatpush.msra.mxu0 %v213
    %335 = vmatpush.msra.mxu0 %v209
    %336 = vmatpush.msra.mxu0 %v205
    %337 = vmatpush.msra.mxu0 %v201
    %338 = vmatmul.f32.gmra.mxu0 %v197
    %v339 = vpop.f32.mrf.mxu0
    %v340 = vadd.f32 0.0, %v339
    %341 = vdwg.mxu0
    %v346 = vrot.slane %v300, 7
    %v347 = vrot.slane %v320, 6
    %v348 = vrot.slane %v340, 5
    %vm349 = vcmask 1040384
    %v350 = vsel %vm349, %v280, %v346
    %vm351 = vcmask 1042434
    %v352 = vsel %vm351, %v347, %v348
    %v353 = vsel %vm186, %v350, %v352
    %v355 = vadd.f32 %v196, %v353
    %v356 = vxor.u32 %v355, 2147483648
    %v357 = vmul.f32 %v356, 1.442695
    %v358 = vpow.pop %v357
    %v359 = vadd.f32 %v358, 1.0
    %v360 = vrcp.pop %v359
    %v361 = vmul.f32 %v359, %v360
    %v362 = vsub.f32 1.0, %v361
    %v363 = vmul.f32 %v360, %v362
    %v364 = vadd.f32 %v360, %v363
    %vm365 = vweird.f32 %v359
    %vm366 = vweird.f32 %v360
    %vm367 = vmor %vm365, %vm366
    %v368 = vsel %vm367, %v360, %v364
    %v369 = vand.u32 2147483647, %v359
    %vm370 = vcmp.eq.f32.partialorder %v369, 8.507059e+37
    %v371 = vand.u32 %v359, 2147483648
    %v372 = vor.u32 1.1754944e-38, %v371
    %v373 = vsel %vm370, %v372, %v368
    %v374 = vmul.f32 1.0, %v373
    %v376 = vrot.slane %v355, 1
    %v378 = vxor.u32 %v376, 2147483648
    %v379 = vmul.f32 %v378, 1.442695
    %v380 = vpow.pop %v379
    %v381 = vadd.f32 %v380, 1.0
    %v382 = vrcp.pop %v381
    %v383 = vmul.f32 %v381, %v382
    %v384 = vsub.f32 1.0, %v383
    %v385 = vmul.f32 %v382, %v384
    %v386 = vadd.f32 %v382, %v385
    %vm387 = vweird.f32 %v381
    %vm388 = vweird.f32 %v382
    %vm389 = vmor %vm387, %vm388
    %v390 = vsel %vm389, %v382, %v386
    %v391 = vand.u32 2147483647, %v381
    %vm392 = vcmp.eq.f32.partialorder %v391, 8.507059e+37
    %v393 = vand.u32 %v381, 2147483648
    %v394 = vor.u32 1.1754944e-38, %v393
    %v395 = vsel %vm392, %v394, %v390
    %v396 = vmul.f32 1.0, %v395
    %v397 = vrot.slane %v355, 2
    %v399 = vtanh.pop %v397
    %v400 = vrot.slane %v355, 3
    %v402 = vxor.u32 %v400, 2147483648
    %v403 = vmul.f32 %v402, 1.442695
    %v404 = vpow.pop %v403
    %v405 = vadd.f32 %v404, 1.0
    %v406 = vrcp.pop %v405
    %v407 = vmul.f32 %v405, %v406
    %v408 = vsub.f32 1.0, %v407
    %v409 = vmul.f32 %v406, %v408
    %v410 = vadd.f32 %v406, %v409
    %vm411 = vweird.f32 %v405
    %vm412 = vweird.f32 %v406
    %vm413 = vmor %vm411, %vm412
    %v414 = vsel %vm413, %v406, %v410
    %v415 = vand.u32 2147483647, %v405
    %vm416 = vcmp.eq.f32.partialorder %v415, 8.507059e+37
    %v417 = vand.u32 %v405, 2147483648
    %v418 = vor.u32 1.1754944e-38, %v417
    %v419 = vsel %vm416, %v418, %v414
    %v420 = vmul.f32 1.0, %v419
    %v421 = vld [vmem:[#allocation5] sm:$0x1]
    %v422 = vmul.f32 %v396, %v421
    %v423 = vmul.f32 %v374, %v399
    %v424 = vadd.f32 %v422, %v423
    %v425 = vtanh.pop %v424
    %v426 = vmul.f32 %v420, %v425
    %427 = vst [vmem:[#allocation5] sm:$0x1] %v424
    %428 = vst [vmem:[#allocation4] sm:$0x1] %v426
    %429 = vst [vmem:[#allocation3] sm:$0x1] %v426
    %s430 = scalar_lea.vmem [#allocation2], 1
    %v431 = vld [vmem:[%s430] ss:$2 sm:$0xf]
    %v432 = vld [vmem:[#allocation4] sm:$0x1]
    %v433 = vld [vmem:[%s2] sm:$0xff]
    %v434 = vld [vmem:[%s2 + $0x8] sm:$0xff]
    %v435 = vld [vmem:[%s2 + $0x10] sm:$0xff]
    %v436 = vld [vmem:[%s2 + $0x18] sm:$0xff]
    %v437 = vld [vmem:[%s2 + $0x20] sm:$0xff]
    %v438 = vld [vmem:[%s2 + $0x28] sm:$0xff]
    %v439 = vld [vmem:[%s2 + $0x30] sm:$0xff]
    %v440 = vld [vmem:[%s2 + $0x38] sm:$0xff]
    %v441 = vld [vmem:[%s2 + $0x40] sm:$0xff]
    %v442 = vld [vmem:[%s2 + $0x48] sm:$0xff]
    %v443 = vld [vmem:[%s2 + $0x50] sm:$0xff]
    %v444 = vld [vmem:[%s2 + $0x58] sm:$0xff]
    %v445 = vld [vmem:[%s2 + $0x60] sm:$0xff]
    %v446 = vld [vmem:[%s2 + $0x68] sm:$0xff]
    %v447 = vld [vmem:[%s2 + $0x70] sm:$0xff]
    %v448 = vld [vmem:[%s2 + $0x78] sm:$0xff]
    %v449 = vld [vmem:[%s2 + $0x80] sm:$0xff]
    %v450 = vld [vmem:[%s2 + $0x88] sm:$0xff]
    %v451 = vld [vmem:[%s2 + $0x90] sm:$0xff]
    %v452 = vld [vmem:[%s2 + $0x98] sm:$0xff]
    %v453 = vld [vmem:[%s2 + $0xa0] sm:$0xff]
    %v454 = vld [vmem:[%s2 + $0xa8] sm:$0xff]
    %v455 = vld [vmem:[%s2 + $0xb0] sm:$0xff]
    %v456 = vld [vmem:[%s2 + $0xb8] sm:$0xff]
    %v457 = vld [vmem:[%s2 + $0xc0] sm:$0xff]
    %v458 = vld [vmem:[%s2 + $0xc8] sm:$0xff]
    %v459 = vld [vmem:[%s2 + $0xd0] sm:$0xff]
    %v460 = vld [vmem:[%s2 + $0xd8] sm:$0xff]
    %v461 = vld [vmem:[%s2 + $0xe0] sm:$0xff]
    %v462 = vld [vmem:[%s2 + $0xe8] sm:$0xff]
    %v463 = vld [vmem:[%s2 + $0xf0] sm:$0xff]
    %v464 = vld [vmem:[%s2 + $0xf8] sm:$0xff]
    %v465 = vld [vmem:[%s2 + $0x100] sm:$0xff]
    %v466 = vld [vmem:[%s2 + $0x108] sm:$0xff]
    %v467 = vld [vmem:[%s2 + $0x110] sm:$0xff]
    %v468 = vld [vmem:[%s2 + $0x118] sm:$0xff]
    %v469 = vld [vmem:[%s2 + $0x120] sm:$0xff]
    %v470 = vld [vmem:[%s2 + $0x128] sm:$0xff]
    %v471 = vld [vmem:[%s2 + $0x130] sm:$0xff]
    %v472 = vld [vmem:[%s2 + $0x138] sm:$0xff]
    %v473 = vld [vmem:[%s2 + $0x140] sm:$0xff]
    %v474 = vld [vmem:[%s2 + $0x148] sm:$0xff]
    %v475 = vld [vmem:[%s2 + $0x150] sm:$0xff]
    %v476 = vld [vmem:[%s2 + $0x158] sm:$0xff]
    %v477 = vld [vmem:[%s2 + $0x160] sm:$0xff]
    %v478 = vld [vmem:[%s2 + $0x168] sm:$0xff]
    %v479 = vld [vmem:[%s2 + $0x170] sm:$0xff]
    %v480 = vld [vmem:[%s2 + $0x178] sm:$0xff]
    %v481 = vld [vmem:[%s2 + $0x180] sm:$0xff]
    %v482 = vld [vmem:[%s2 + $0x188] sm:$0xff]
    %v483 = vld [vmem:[%s2 + $0x190] sm:$0xff]
    %v484 = vld [vmem:[%s2 + $0x198] sm:$0xff]
    %v485 = vld [vmem:[%s2 + $0x1a0] sm:$0xff]
    %v486 = vld [vmem:[%s2 + $0x1a8] sm:$0xff]
    %v487 = vld [vmem:[%s2 + $0x1b0] sm:$0xff]
    %v488 = vld [vmem:[%s2 + $0x1b8] sm:$0xff]
    %v489 = vld [vmem:[%s2 + $0x1c0] sm:$0xff]
    %v490 = vld [vmem:[%s2 + $0x1c8] sm:$0xff]
    %v491 = vld [vmem:[%s2 + $0x1d0] sm:$0xff]
    %v492 = vld [vmem:[%s2 + $0x1d8] sm:$0xff]
    %v493 = vld [vmem:[%s2 + $0x1e0] sm:$0xff]
    %v494 = vld [vmem:[%s2 + $0x1e8] sm:$0xff]
    %v495 = vld [vmem:[%s2 + $0x1f0] sm:$0xff]
    %v496 = vld [vmem:[%s2 + $0x1f8] sm:$0xff]
    %497 = vmatpush.msra.mxu0 %v493
    %498 = vmatpush.msra.mxu0 %v489
    %499 = vmatpush.msra.mxu0 %v485
    %500 = vmatpush.msra.mxu0 %v481
    %501 = vmatpush.msra.mxu0 %v477
    %502 = vmatpush.msra.mxu0 %v473
    %503 = vmatpush.msra.mxu0 %v469
    %504 = vmatpush.msra.mxu0 %v465
    %505 = vmatpush.msra.mxu0 %v461
    %506 = vmatpush.msra.mxu0 %v457
    %507 = vmatpush.msra.mxu0 %v453
    %508 = vmatpush.msra.mxu0 %v449
    %509 = vmatpush.msra.mxu0 %v445
    %510 = vmatpush.msra.mxu0 %v441
    %511 = vmatpush.msra.mxu0 %v437
    %512 = vmatpush.msra.mxu0 %v433
    %513 = vmatmul.f32.gmra.mxu0 %v432
    %v514 = vpop.f32.mrf.mxu0
    %v515 = vadd.f32 0.0, %v514
    %516 = vdwg.mxu0
    %517 = vmatpush.msra.mxu0 %v494
    %518 = vmatpush.msra.mxu0 %v490
    %519 = vmatpush.msra.mxu0 %v486
    %520 = vmatpush.msra.mxu0 %v482
    %521 = vmatpush.msra.mxu0 %v478
    %522 = vmatpush.msra.mxu0 %v474
    %523 = vmatpush.msra.mxu0 %v470
    %524 = vmatpush.msra.mxu0 %v466
    %525 = vmatpush.msra.mxu0 %v462
    %526 = vmatpush.msra.mxu0 %v458
    %527 = vmatpush.msra.mxu0 %v454
    %528 = vmatpush.msra.mxu0 %v450
    %529 = vmatpush.msra.mxu0 %v446
    %530 = vmatpush.msra.mxu0 %v442
    %531 = vmatpush.msra.mxu0 %v438
    %532 = vmatpush.msra.mxu0 %v434
    %533 = vmatmul.f32.gmra.mxu0 %v432
    %v534 = vpop.f32.mrf.mxu0
    %v535 = vadd.f32 0.0, %v534
    %536 = vdwg.mxu0
    %537 = vmatpush.msra.mxu0 %v495
    %538 = vmatpush.msra.mxu0 %v491
    %539 = vmatpush.msra.mxu0 %v487
    %540 = vmatpush.msra.mxu0 %v483
    %541 = vmatpush.msra.mxu0 %v479
    %542 = vmatpush.msra.mxu0 %v475
    %543 = vmatpush.msra.mxu0 %v471
    %544 = vmatpush.msra.mxu0 %v467
    %545 = vmatpush.msra.mxu0 %v463
    %546 = vmatpush.msra.mxu0 %v459
    %547 = vmatpush.msra.mxu0 %v455
    %548 = vmatpush.msra.mxu0 %v451
    %549 = vmatpush.msra.mxu0 %v447
    %550 = vmatpush.msra.mxu0 %v443
    %551 = vmatpush.msra.mxu0 %v439
    %552 = vmatpush.msra.mxu0 %v435
    %553 = vmatmul.f32.gmra.mxu0 %v432
    %v554 = vpop.f32.mrf.mxu0
    %v555 = vadd.f32 0.0, %v554
    %556 = vdwg.mxu0
    %557 = vmatpush.msra.mxu0 %v496
    %558 = vmatpush.msra.mxu0 %v492
    %559 = vmatpush.msra.mxu0 %v488
    %560 = vmatpush.msra.mxu0 %v484
    %561 = vmatpush.msra.mxu0 %v480
    %562 = vmatpush.msra.mxu0 %v476
    %563 = vmatpush.msra.mxu0 %v472
    %564 = vmatpush.msra.mxu0 %v468
    %565 = vmatpush.msra.mxu0 %v464
    %566 = vmatpush.msra.mxu0 %v460
    %567 = vmatpush.msra.mxu0 %v456
    %568 = vmatpush.msra.mxu0 %v452
    %569 = vmatpush.msra.mxu0 %v448
    %570 = vmatpush.msra.mxu0 %v444
    %571 = vmatpush.msra.mxu0 %v440
    %572 = vmatpush.msra.mxu0 %v436
    %573 = vmatmul.f32.gmra.mxu0 %v432
    %v574 = vpop.f32.mrf.mxu0
    %v575 = vadd.f32 0.0, %v574
    %576 = vdwg.mxu0
    %v581 = vrot.slane %v535, 7
    %v582 = vrot.slane %v555, 6
    %v583 = vrot.slane %v575, 5
    %v584 = vsel %vm349, %v515, %v581
    %v585 = vsel %vm351, %v582, %v583
    %v586 = vsel %vm186, %v584, %v585
    %v588 = vadd.f32 %v431, %v586
    %v589 = vxor.u32 %v588, 2147483648
    %v590 = vmul.f32 %v589, 1.442695
    %v591 = vpow.pop %v590
    %v592 = vadd.f32 %v591, 1.0
    %v593 = vrcp.pop %v592
    %v594 = vmul.f32 %v592, %v593
    %v595 = vsub.f32 1.0, %v594
    %v596 = vmul.f32 %v593, %v595
    %v597 = vadd.f32 %v593, %v596
    %vm598 = vweird.f32 %v592
    %vm599 = vweird.f32 %v593
    %vm600 = vmor %vm598, %vm599
    %v601 = vsel %vm600, %v593, %v597
    %v602 = vand.u32 2147483647, %v592
    %vm603 = vcmp.eq.f32.partialorder %v602, 8.507059e+37
    %v604 = vand.u32 %v592, 2147483648
    %v605 = vor.u32 1.1754944e-38, %v604
    %v606 = vsel %vm603, %v605, %v601
    %v607 = vmul.f32 1.0, %v606
    %v609 = vrot.slane %v588, 1
    %v611 = vxor.u32 %v609, 2147483648
    %v612 = vmul.f32 %v611, 1.442695
    %v613 = vpow.pop %v612
    %v614 = vadd.f32 %v613, 1.0
    %v615 = vrcp.pop %v614
    %v616 = vmul.f32 %v614, %v615
    %v617 = vsub.f32 1.0, %v616
    %v618 = vmul.f32 %v615, %v617
    %v619 = vadd.f32 %v615, %v618
    %vm620 = vweird.f32 %v614
    %vm621 = vweird.f32 %v615
    %vm622 = vmor %vm620, %vm621
    %v623 = vsel %vm622, %v615, %v619
    %v624 = vand.u32 2147483647, %v614
    %vm625 = vcmp.eq.f32.partialorder %v624, 8.507059e+37
    %v626 = vand.u32 %v614, 2147483648
    %v627 = vor.u32 1.1754944e-38, %v626
    %v628 = vsel %vm625, %v627, %v623
    %v629 = vmul.f32 1.0, %v628
    %v630 = vrot.slane %v588, 2
    %v632 = vtanh.pop %v630
    %v633 = vrot.slane %v588, 3
    %v635 = vxor.u32 %v633, 2147483648
    %v636 = vmul.f32 %v635, 1.442695
    %v637 = vpow.pop %v636
    %v638 = vadd.f32 %v637, 1.0
    %v639 = vrcp.pop %v638
    %v640 = vmul.f32 %v638, %v639
    %v641 = vsub.f32 1.0, %v640
    %v642 = vmul.f32 %v639, %v641
    %v643 = vadd.f32 %v639, %v642
    %vm644 = vweird.f32 %v638
    %vm645 = vweird.f32 %v639
    %vm646 = vmor %vm644, %vm645
    %v647 = vsel %vm646, %v639, %v643
    %v648 = vand.u32 2147483647, %v638
    %vm649 = vcmp.eq.f32.partialorder %v648, 8.507059e+37
    %v650 = vand.u32 %v638, 2147483648
    %v651 = vor.u32 1.1754944e-38, %v650
    %v652 = vsel %vm649, %v651, %v647
    %v653 = vmul.f32 1.0, %v652
    %v654 = vld [vmem:[#allocation5] sm:$0x1]
    %v655 = vmul.f32 %v629, %v654
    %v656 = vmul.f32 %v607, %v632
    %v657 = vadd.f32 %v655, %v656
    %v658 = vtanh.pop %v657
    %v659 = vmul.f32 %v653, %v658
    %660 = vst [vmem:[#allocation5] sm:$0x1] %v657
    %661 = vst [vmem:[#allocation4] sm:$0x1] %v659
    %662 = vst [vmem:[#allocation3 + $0x1] sm:$0x1] %v659
    %v663 = vld [vmem:[#allocation3] sm:$0x3]
    %v664 = vld [vmem:[%s4] sm:$0xff]
    %v665 = vld [vmem:[%s4 + $0x8] sm:$0xff]
    %v666 = vld [vmem:[%s4 + $0x10] sm:$0xff]
    %v667 = vld [vmem:[%s4 + $0x18] sm:$0xff]
    %v668 = vld [vmem:[%s4 + $0x20] sm:$0xff]
    %v669 = vld [vmem:[%s4 + $0x28] sm:$0xff]
    %v670 = vld [vmem:[%s4 + $0x30] sm:$0xff]
    %v671 = vld [vmem:[%s4 + $0x38] sm:$0xff]
    %v672 = vld [vmem:[%s4 + $0x40] sm:$0xff]
    %v673 = vld [vmem:[%s4 + $0x48] sm:$0xff]
    %v674 = vld [vmem:[%s4 + $0x50] sm:$0xff]
    %v675 = vld [vmem:[%s4 + $0x58] sm:$0xff]
    %v676 = vld [vmem:[%s4 + $0x60] sm:$0xff]
    %v677 = vld [vmem:[%s4 + $0x68] sm:$0xff]
    %v678 = vld [vmem:[%s4 + $0x70] sm:$0xff]
    %v679 = vld [vmem:[%s4 + $0x78] sm:$0xff]
    %v680 = vld [vmem:[%s5] sm:$0x1]
    %v682 = vperm.slane %v680, 0
    %684 = vmatpush.msra.mxu0 %v679
    %685 = vmatpush.msra.mxu0 %v678
    %686 = vmatpush.msra.mxu0 %v677
    %687 = vmatpush.msra.mxu0 %v676
    %688 = vmatpush.msra.mxu0 %v675
    %689 = vmatpush.msra.mxu0 %v674
    %690 = vmatpush.msra.mxu0 %v673
    %691 = vmatpush.msra.mxu0 %v672
    %692 = vmatpush.msra.mxu0 %v671
    %693 = vmatpush.msra.mxu0 %v670
    %694 = vmatpush.msra.mxu0 %v669
    %695 = vmatpush.msra.mxu0 %v668
    %696 = vmatpush.msra.mxu0 %v667
    %697 = vmatpush.msra.mxu0 %v666
    %698 = vmatpush.msra.mxu0 %v665
    %699 = vmatpush.msra.mxu0 %v664
    %700 = vmatmul.f32.gmra.mxu0 %v663
    %v701 = vpop.f32.mrf.mxu0
    %v702 = vadd.f32 %v682, %v701
    %703 = vdwg.mxu0
    %704 = vst [vmem:[#allocation6] sm:$0x3] %v702
    // Predicated region
    $region26: #{crnn_forward.5} parent=1 // pred_check
      _
    $region27: #{crnn_forward.5} parent=1 // pred_check_branch
      %706 = sbr.rel (0) target = $region29
    $region28: #{crnn_forward.5} parent=1 // pred_region
      %708 = vsyncadd [#allocation7], 0
      %s710 = sshll.u32 [#allocation6], 4
      %s711 = int_to_ptr.vmem [resolvable:$true] %s710
      %s712 = sshll.u32 %s6, 4
      %s713 = int_to_ptr.hbm [resolvable:$true] %s712
      %715 = dma.vmem_to_hbm [thread:$0]  %s711, 32, %s713, [#allocation7]
    $region29: #{crnn_forward.5} parent=1 // pred_fallthru
      _
    // Predicated region
    $region30: #{crnn_forward.5} parent=1 // pred_check
      _
    $region31: #{crnn_forward.5} parent=1 // pred_check_branch
      %717 = sbr.rel (0) target = $region33
    $region32: #{crnn_forward.5} parent=1 // pred_region
      %719 = dma.done [#allocation7], 32
    $region33: #{crnn_forward.5} parent=1 // pred_fallthru
      _
    %720 = vsyncpa [#allocation7], 1

</llo_original>
